<compile_context>
chip_gen: v6e
topology: v6e:2x2x1
jax: 0.10.0
libtpu: 0.0.40
codegen_flags: <defaults>
</compile_context>

<pallas_src>
import math

import jax
import jax.numpy as jnp
from jax.experimental import pallas as pl
from jax.experimental.pallas import tpu as pltpu

_GN_EPS = 1e-5
_GN_GROUPS = 32
_LANE = 128
_M_TARGET = 512                      # target MXU M rows per block (sample batching)
_VMEM_LIMIT = 32 * 1024 * 1024       # safe on v7x (64 MiB physical) and v5e/v6e
_ACT_DTYPE = jnp.bfloat16            # activation / state / weight storage dtype


def _round_up(x, m):
    return ((x + m - 1) // m) * m


def _pick_samples_per_block(n, hw, m_target=_M_TARGET):
    """Largest divisor S of n with S*hw <= m_target (>=1)."""
    best = 1
    for s in range(1, n + 1):
        if n % s == 0 and s * hw <= m_target:
            best = s
    return best


# --------------------------------------------------------------------------
# Pallas kernels
# --------------------------------------------------------------------------
def _make_conv_gn_kernel(*, n_strips, row_step, m_rows, kc, s, hw,
                         inv_count, has_state, eps=_GN_EPS):
    """Fused conv-matmul + GroupNorm(32) + ReLU (+ recurrent state add) kernel.

    Refs (in order): col, w, bgb, gm, [pool, bcast] if s>1, [state] if has_state, out.
      col   : [m_in, kc]       bf16   m_in = m_rows + (n_strips-1)*row_step
      w     : [k_pad, C]       bf16   k_pad == n_strips * kc
      bgb   : [3, C]           f32    rows = (conv bias, gamma, beta)
      gm    : [C, C]           bf16   GN group-membership (0/1)
      pool  : [s, m_rows]      bf16   per-sample row-sum selector      (only if s > 1)
      bcast : [m_rows, s]      bf16   per-sample broadcast-back matrix (only if s > 1)
      state : [m_rows, C]      bf16
      out   : [m_rows, C]      bf16
    """

    def kernel(col_ref, w_ref, bgb_ref, gm_ref, *rest):
        i = 0
        pool_ref = bcast_ref = st_ref = None
        if s > 1:
            pool_ref, bcast_ref = rest[0], rest[1]
            i = 2
        if has_state:
            st_ref = rest[i]
            i += 1
        o_ref = rest[i]

        # --- conv: n_strips accumulated MXU matmuls over shifted row windows ---
        if n_strips == 1:
            x = jnp.dot(col_ref[...], w_ref[...],
                        preferred_element_type=jnp.float32)          # [M, C] f32
        else:
            x = jnp.dot(col_ref[pl.ds(0, m_rows), :],
                        w_ref[pl.ds(0, kc), :],
                        preferred_element_type=jnp.float32)
            for t in range(1, n_strips):
                x = x + jnp.dot(col_ref[pl.ds(t * row_step, m_rows), :],
                                w_ref[pl.ds(t * kc, kc), :],
                                preferred_element_type=jnp.float32)

        bias = bgb_ref[0:1, :]                                        # [1, C]
        gamma = bgb_ref[1:2, :]
        beta = bgb_ref[2:3, :]
        gm = gm_ref[...].astype(jnp.float32)                          # [C, C]

        # --- single-pass GroupNorm stats (bias folded analytically) ---
        if s > 1:
            pool = pool_ref[...].astype(jnp.float32)                  # [S, M]
            s1 = jnp.dot(pool, x, preferred_element_type=jnp.float32)        # [S, C]
            s2 = jnp.dot(pool, x * x, preferred_element_type=jnp.float32)    # [S, C]
        else:
            s1 = jnp.sum(x, axis=0, keepdims=True)                    # [1, C]
            s2 = jnp.sum(x * x, axis=0, keepdims=True)
        s1b = s1 + hw * bias
        s2b = s2 + 2.0 * bias * s1 + hw * (bias * bias)
        grp = jnp.dot(jnp.concatenate([s1b, s2b], axis=0), gm,
                      preferred_element_type=jnp.float32) * inv_count         # [2S, C]
        mean = grp[:s]
        var = grp[s:] - mean * mean
        scale = gamma * jax.lax.rsqrt(var + eps)                      # [S, C]
        shift = beta + (bias - mean) * scale                          # [S, C]
        if s > 1:
            bc = bcast_ref[...].astype(jnp.float32)                   # [M, S]
            scale = jnp.dot(bc, scale, preferred_element_type=jnp.float32)    # [M, C]
            shift = jnp.dot(bc, shift, preferred_element_type=jnp.float32)

        y = jnp.maximum(x * scale + shift, 0.0)
        if st_ref is not None:
            y = y + st_ref[...].astype(jnp.float32)
        o_ref[...] = y.astype(o_ref.dtype)

    return kernel


# --------------------------------------------------------------------------
# Pallas wrappers
# --------------------------------------------------------------------------
def _conv_gn_relu(col, w_mat, bgb, gmat, *, n_strips, row_step, hw, s, cg,
                  state=None):
    """col: [G, m_in, kc] bf16 (G = N // s sample groups); w_mat: [k_pad, C] bf16;
       bgb: [3, C] f32; gmat: [C, C] bf16; state: None or [G, s*hw, C] bf16.
       Returns relu(GroupNorm(conv)) (+ state): [G, s*hw, C] bf16."""
    assert n_strips == 1 or s == 1
    g, m_in, kc = col.shape
    c_pad = w_mat.shape[1]
    m_rows = s * hw
    inv_count = 1.0 / (hw * cg)
    has_state = state is not None

    kernel = _make_conv_gn_kernel(
        n_strips=n_strips, row_step=row_step, m_rows=m_rows, kc=kc, s=s, hw=hw,
        inv_count=inv_count, has_state=has_state)

    in_specs = [
        pl.BlockSpec((None, m_in, kc), lambda i: (i, 0, 0)),
        pl.BlockSpec(w_mat.shape, lambda i: (0, 0)),
        pl.BlockSpec(bgb.shape, lambda i: (0, 0)),
        pl.BlockSpec(gmat.shape, lambda i: (0, 0)),
    ]
    args = [col, w_mat, bgb, gmat]
    if s > 1:
        rows = jnp.arange(m_rows) // hw
        pool = (rows[None, :] == jnp.arange(s)[:, None]).astype(jnp.bfloat16)  # [S, M]
        bcast = jnp.transpose(pool)                                            # [M, S]
        in_specs += [pl.BlockSpec(pool.shape, lambda i: (0, 0)),
                     pl.BlockSpec(bcast.shape, lambda i: (0, 0))]
        args += [pool, bcast]
    if has_state:
        in_specs.append(pl.BlockSpec((None, m_rows, c_pad), lambda i: (i, 0, 0)))
        args.append(state)

    cost = pl.CostEstimate(
        flops=2 * g * n_strips * m_rows * kc * c_pad,
        transcendentals=g * s * c_pad,
        bytes_accessed=(col.size * 2 + w_mat.size * 2 + gmat.size * 2
                        + g * m_rows * c_pad * 2
                        + (state.size * 2 if has_state else 0)))

    return pl.pallas_call(
        kernel,
        out_shape=jax.ShapeDtypeStruct((g, m_rows, c_pad), _ACT_DTYPE),
        grid_spec=pltpu.PrefetchScalarGridSpec(
            num_scalar_prefetch=0,
            grid=(g,),
            in_specs=in_specs,
            out_specs=pl.BlockSpec((None, m_rows, c_pad), lambda i: (i, 0, 0))),
        compiler_params=pltpu.CompilerParams(
            dimension_semantics=("parallel",),
            vmem_limit_bytes=_VMEM_LIMIT),
        cost_estimate=cost,
    )(*args)


def avgpool_linear(x, w, b, num_classes):
    """x: [TB, HW, C] bf16; w: [C, NC_pad] bf16; b: [1, NC_pad] f32 -> [TB, num_classes]."""
    tb, hw, c = x.shape
    nc_pad = w.shape[1]
    x2 = x.reshape(tb * hw, c)
    rows = jnp.arange(tb * hw) // hw
    pool = (rows[None, :] == jnp.arange(tb)[:, None]).astype(jnp.bfloat16)    # [TB, TB*HW]
    inv_hw = 1.0 / hw

    def kernel(x_ref, pool_ref, w_ref, b_ref, o_ref):
        xv = x_ref[...].astype(jnp.float32)
        pooled = jnp.dot(pool_ref[...].astype(jnp.float32), xv,
                         preferred_element_type=jnp.float32) * inv_hw          # [TB, C]
        o_ref[...] = jnp.dot(pooled.astype(jnp.bfloat16), w_ref[...],
                             preferred_element_type=jnp.float32) + b_ref[...]

    out = pl.pallas_call(
        kernel,
        out_shape=jax.ShapeDtypeStruct((tb, nc_pad), jnp.float32),
        grid_spec=pltpu.PrefetchScalarGridSpec(
            num_scalar_prefetch=0,
            grid=(1,),
            in_specs=[pl.BlockSpec((tb * hw, c), lambda i: (0, 0)),
                      pl.BlockSpec((tb, tb * hw), lambda i: (0, 0)),
                      pl.BlockSpec((c, nc_pad), lambda i: (0, 0)),
                      pl.BlockSpec((1, nc_pad), lambda i: (0, 0))],
            out_specs=pl.BlockSpec((tb, nc_pad), lambda i: (0, 0))),
        compiler_params=pltpu.CompilerParams(
            dimension_semantics=("arbitrary",),
            vmem_limit_bytes=_VMEM_LIMIT),
    )(x2, pool, w, b)
    return out[:, :num_classes]


# --------------------------------------------------------------------------
# im2col glue (pure data movement in XLA, bf16)
# --------------------------------------------------------------------------
def _im2col_nhwc(x, k, stride, pad, k_pad):
    """x: [N, H, W, C] -> col [N, OH*OW, k_pad] bf16, columns ordered (kh, kw, c)."""
    x = x.astype(_ACT_DTYPE)
    n, h, w, c = x.shape
    xp = jnp.pad(x, ((0, 0), (pad, pad), (pad, pad), (0, 0)))
    oh = (h + 2 * pad - k) // stride + 1
    ow = (w + 2 * pad - k) // stride + 1
    cols = []
    for kh in range(k):
        for kw in range(k):
            cols.append(xp[:, kh:kh + stride * oh:stride,
                              kw:kw + stride * ow:stride, :])
    col = jnp.concatenate(cols, axis=-1).reshape(n, oh * ow, k * k * c)
    if k_pad > k * k * c:
        col = jnp.pad(col, ((0, 0), (0, 0), (0, k_pad - k * k * c)))
    return col, oh, ow


def _im2col_w_strips(x, k):
    """W-only im2col for stride-1 'same' convs: x [N, H, W, C] ->
       [N, (H+2p)*W, k*C] bf16, columns (kw, c).  The kernel takes k shifted
       row-windows of length H*W (row_step = W) -- a (k*k)->(k) HBM-expansion cut."""
    x = x.astype(_ACT_DTYPE)
    n, h, w, c = x.shape
    p = k // 2
    xp = jnp.pad(x, ((0, 0), (p, p), (p, p), (0, 0)))
    slabs = [xp[:, :, kw:kw + w, :] for kw in range(k)]
    colw = jnp.concatenate(slabs, axis=-1)                 # [N, H+2p, W, k*C]
    return colw.reshape(n, (h + 2 * p) * w, k * c)


# --------------------------------------------------------------------------
# Parameters (deterministic in-script init, mirroring the PyTorch module)
# --------------------------------------------------------------------------
def _kaiming_conv(key, cout, cin, k):
    std = math.sqrt(2.0 / (cout * k * k))          # kaiming_normal_(fan_out, relu)
    return std * jax.random.normal(key, (cout, cin, k, k), jnp.float32)


def _conv_weight_matrix(key, cout_real, cin_real, k, cin_pad, cout_pad, k_pad):
    w = _kaiming_conv(key, cout_real, cin_real, k)
    wm = jnp.zeros((k, k, cin_pad, cout_pad), jnp.float32)
    wm = wm.at[:, :, :cin_real, :cout_real].set(jnp.transpose(w, (2, 3, 1, 0)))
    wm = wm.reshape(k * k * cin_pad, cout_pad)
    if k_pad > k * k * cin_pad:
        wm = jnp.pad(wm, ((0, k_pad - k * k * cin_pad), (0, 0)))
    return wm.astype(_ACT_DTYPE)


def _group_matrix(c_real, c_pad, groups=_GN_GROUPS):
    cg = c_real // groups
    ch = jnp.arange(c_pad)
    gid = jnp.where(ch < c_real, ch // cg, -1)
    same = (gid[:, None] == gid[None, :]) & (gid[:, None] >= 0)
    return same.astype(jnp.bfloat16)               # exact 0/1 values


def init_block(key, cin_real, cin_pad, cout_real, k, stride):
    cout_pad = _round_up(cout_real, _LANE)
    k_in_pad = _round_up(k * k * cin_pad, _LANE)
    k_c1_pad = _round_up(9 * cout_pad, _LANE)
    k0, k1, k2 = jax.random.split(key, 3)
    bound = 1.0 / math.sqrt(cin_real * k * k)
    bias = jnp.zeros((cout_pad,), jnp.float32).at[:cout_real].set(
        jax.random.uniform(k1, (cout_real,), jnp.float32, -bound, bound))
    gamma = jnp.zeros((cout_pad,), jnp.float32).at[:cout_real].set(1.0)
    beta = jnp.zeros((cout_pad,), jnp.float32)
    zeros = jnp.zeros((cout_pad,), jnp.float32)
    return dict(
        stride=stride, ksize=k,
        cout_real=cout_real, cout_pad=cout_pad, cg=cout_real // _GN_GROUPS,
        k_input_pad=k_in_pad, k_conv1_pad=k_c1_pad,
        w_input=_conv_weight_matrix(k0, cout_real, cin_real, k,
                                    cin_pad, cout_pad, k_in_pad),
        bgb_input=jnp.stack([bias, gamma, beta], axis=0),        # [3, C]
        w_conv1=_conv_weight_matrix(k2, cout_real, cout_real, 3,
                                    cout_pad, cout_pad, k_c1_pad),   # conv1: no bias
        bgb_1=jnp.stack([zeros, gamma, beta], axis=0),           # [3, C]
        gmat=_group_matrix(cout_real, cout_pad),
    )


def init_params(key, num_classes=101):
    keys = jax.random.split(key, 6)
    params = {
        'V1': init_block(keys[0], 3, 3, 64, 7, 4),
        'V2': init_block(keys[1], 64, 128, 128, 3, 2),
        'V4': init_block(keys[2], 128, 128, 256, 3, 2),
        'IT': init_block(keys[3], 256, 256, 512, 3, 2),
        'num_classes': num_classes,
    }
    nc_pad = _round_up(num_classes, _LANE)
    bound = 1.0 / math.sqrt(512)
    lw = jax.random.uniform(keys[4], (512, num_classes), jnp.float32, -bound, bound)
    lb = jax.random.uniform(keys[5], (num_classes,), jnp.float32, -bound, bound)
    params['linear_w'] = (jnp.zeros((512, nc_pad), jnp.float32)
                          .at[:, :num_classes].set(lw)).astype(_ACT_DTYPE)
    params['linear_b'] = jnp.zeros((1, nc_pad), jnp.float32).at[0, :num_classes].set(lb)
    return params


# --------------------------------------------------------------------------
# Recurrent forward (mirrors CORblock_RT / R_CORnet_RT semantics)
# --------------------------------------------------------------------------
def _conv_input_step(p, x_spatial, state):
    """x_spatial: [N, H, W, Cin] (bf16/f32); state: None or [N, hw, C] bf16.
       skip = relu(GN(conv_input(x))) + state, fused in one pallas_call."""
    n = x_spatial.shape[0]
    col, oh, ow = _im2col_nhwc(x_spatial, p['ksize'], p['stride'],
                               p['ksize'] // 2, p['k_input_pad'])
    hw = oh * ow
    s = _pick_samples_per_block(n, hw)
    col = col.reshape(n // s, s * hw, p['k_input_pad'])
    st = None if state is None else state.reshape(n // s, s * hw, p['cout_pad'])
    y = _conv_gn_relu(col, p['w_input'], p['bgb_input'], p['gmat'],
                      n_strips=1, row_step=0, hw=hw, s=s, cg=p['cg'], state=st)
    return y.reshape(n, hw, p['cout_pad']), oh, ow


def _conv1_step(p, skip, oh, ow):
    """x = relu(GN1(conv1(skip))); skip: [N, hw, C] bf16."""
    n, hw, c = skip.shape
    s = _pick_samples_per_block(n, hw)
    if s == 1:
        # big-HW layers: W-only im2col (3x) + in-kernel kh-shifted matmuls
        colw = _im2col_w_strips(skip.reshape(n, oh, ow, c), 3)
        y = _conv_gn_relu(colw, p['w_conv1'], p['bgb_1'], p['gmat'],
                          n_strips=3, row_step=ow, hw=hw, s=1, cg=p['cg'])
    else:
        # small-HW layers: full im2col + sample-batched M block
        col, _, _ = _im2col_nhwc(skip.reshape(n, oh, ow, c), 3, 1, 1,
                                 p['k_conv1_pad'])
        col = col.reshape(n // s, s * hw, p['k_conv1_pad'])
        y = _conv_gn_relu(col, p['w_conv1'], p['bgb_1'], p['gmat'],
                          n_strips=1, row_step=0, hw=hw, s=s, cg=p['cg'])
    return y.reshape(n, hw, c)


def corblock_rt(p, inp_spatial, state, batch_size=None, out_spatial=None):
    """One CORblock_RT step.
       inp_spatial: [N, H, W, Cin] channels-last, or None (zero-input path).
       state: python 0 (t=0) or [N, hw, Cout_pad] bf16.
       Returns (x [N, hw, Cout_pad] bf16, oh, ow); x is both output and new state."""
    st = None if isinstance(state, (int, float)) else state
    if inp_spatial is None:
        n, oh, ow = batch_size, out_spatial, out_spatial
        if st is None:
            # skip == 0: conv1 (bias-free) of zeros is 0, GN(0) = beta, so the block
            # output is exactly relu(beta) broadcast -- no kernel launch needed.
            beta1 = p['bgb_1'][2:3, :]
            out = jnp.broadcast_to(jnp.maximum(beta1, 0.0),
                                   (n, oh * ow, p['cout_pad'])).astype(_ACT_DTYPE)
            return out, oh, ow
        skip = st
    else:
        n = inp_spatial.shape[0]
        skip, oh, ow = _conv_input_step(p, inp_spatial, st)
    x = _conv1_step(p, skip, oh, ow)
    return x, oh, ow


def r_cornet_rt_forward(params, inp, out_shapes):
    """R_CORnet_RT.forward starting from reset_state(); inp: [T, B, 3, H, W] (NCHW)."""
    times, batch = inp.shape[0], inp.shape[1]
    inp_nhwc = jnp.transpose(inp, (0, 1, 3, 4, 2)).astype(_ACT_DTYPE)
    blocks = ['V1', 'V2', 'V4', 'IT']
    states = {b: 0 for b in blocks}
    outputs = {b: [] for b in blocks}
    spatial = {}

    # t = 0 pass (non-V1 blocks see final_outputs == None -> zero-input path)
    for bi, b in enumerate(blocks):
        this_inp = inp_nhwc[0] if bi == 0 else None
        o, oh, ow = corblock_rt(params[b], this_inp, states[b],
                                batch_size=batch, out_spatial=out_shapes[b])
        spatial[b] = (oh, ow)
        outputs[b].append(o)
        states[b] = o

    # t >= 1 recurrent passes
    for t in range(1, times):
        for bi, b in enumerate(blocks):
            if bi == 0:
                prev_sp = inp_nhwc[t]
            else:
                prev = blocks[bi - 1]
                po = outputs[prev][t - 1]
                poh, pow_ = spatial[prev]
                prev_sp = po.reshape(batch, poh, pow_, po.shape[-1])
            o, _, _ = corblock_rt(params[b], prev_sp, states[b])
            outputs[b].append(o)
            states[b] = o

    it_oh, it_ow = spatial['IT']
    out = jnp.stack(outputs['IT'], axis=0)                     # [T, B, hw_it, 512] bf16
    out = out.reshape(times * batch, it_oh * it_ow, params['IT']['cout_pad'])
    logits = avgpool_linear(out, params['linear_w'], params['linear_b'],
                            params['num_classes'])
    return logits.reshape(times, -1, params['num_classes'])


# --------------------------------------------------------------------------
if __name__ == "__main__":
    key = jax.random.PRNGKey(0)
    pkey, xkey = jax.random.split(key)
    params = init_params(pkey, num_classes=101)

    # small shapes: times=2, batch=2, 3x96x96 input (downscaled analogue of the 224
    # ImageNet input; V1 HW=576 exercises the strip-fused conv1 path, V2/V4/IT
    # exercise the sample-batched path and the t=0 zero-input shortcut)
    times, batch, spatial = 2, 2, 96
    inp = jax.random.normal(xkey, (times, batch, 3, spatial, spatial), jnp.float32)

    s1 = (spatial + 2 * 3 - 7) // 4 + 1
    s2 = (s1 + 2 - 3) // 2 + 1
    s4 = (s2 + 2 - 3) // 2 + 1
    sit = (s4 + 2 - 3) // 2 + 1
    out_shapes = {'V1': s1, 'V2': s2, 'V4': s4, 'IT': sit}

    out = r_cornet_rt_forward(params, inp, out_shapes)
    out = jax.block_until_ready(out)

    assert out.shape == (times, batch, 101), out.shape
    assert bool(jnp.all(jnp.isfinite(out)))
    print("KERNEL_OK")
</pallas_src>

<mosaic_0001>
module attributes {stable_mosaic.version = 11 : i64} {
  func.func @kernel(%arg0: i32, %arg1: memref<1x576x256xbf16, #tpu.memory_space<vmem>>, %arg2: memref<256x128xbf16, #tpu.memory_space<vmem>>, %arg3: memref<3x128xf32, #tpu.memory_space<vmem>>, %arg4: memref<128x128xbf16, #tpu.memory_space<vmem>>, %arg5: memref<1x576x128xbf16, #tpu.memory_space<vmem>>) attributes {dimension_semantics = [#tpu.dimension_semantics<parallel>], iteration_bounds = array<i64: 2>, scalar_prefetch = 0 : i64, scratch_operands = 0 : i64, tpu.core_type = #tpu.core_type<tc>, window_params = [{transform_indices = @transform_0, window_bounds = array<i64: 1, 576, 256>}, {pipeline_mode = #tpu.pipeline_mode<synchronous>, transform_indices = @transform_1, window_bounds = array<i64: 256, 128>}, {pipeline_mode = #tpu.pipeline_mode<synchronous>, transform_indices = @transform_2, window_bounds = array<i64: 3, 128>}, {pipeline_mode = #tpu.pipeline_mode<synchronous>, transform_indices = @transform_3, window_bounds = array<i64: 128, 128>}, {transform_indices = @transform_4, window_bounds = array<i64: 1, 576, 128>}]} {
    %c0 = arith.constant 0 : index
    %c0_0 = arith.constant 0 : index
    %c0_1 = arith.constant 0 : index
    %0 = vector.load %arg1[%c0, %c0_0, %c0_1] : memref<1x576x256xbf16, #tpu.memory_space<vmem>>, vector<1x576x256xbf16>
    %1 = vector.shape_cast %0 : vector<1x576x256xbf16> to vector<576x256xbf16>
    %c0_2 = arith.constant 0 : index
    %c0_3 = arith.constant 0 : index
    %2 = vector.load %arg2[%c0_2, %c0_3] : memref<256x128xbf16, #tpu.memory_space<vmem>>, vector<256x128xbf16>
    %cst = arith.constant dense<0.000000e+00> : vector<576x128xf32>
    %3 = tpu.matmul %1, %2, %cst {dimension_numbers = #tpu.dot_dimension_numbers<[1], [0], [0], [1], [0, 0, 1, 1], [], []>} : vector<576x256xbf16>, vector<256x128xbf16>, vector<576x128xf32> -> vector<576x128xf32>
    %c0_4 = arith.constant 0 : index
    %c0_5 = arith.constant 0 : index
    %4 = vector.load %arg3[%c0_4, %c0_5] : memref<3x128xf32, #tpu.memory_space<vmem>>, vector<1x128xf32>
    %c1 = arith.constant 1 : index
    %c0_6 = arith.constant 0 : index
    %5 = vector.load %arg3[%c1, %c0_6] : memref<3x128xf32, #tpu.memory_space<vmem>>, vector<1x128xf32>
    %c2 = arith.constant 2 : index
    %c0_7 = arith.constant 0 : index
    %6 = vector.load %arg3[%c2, %c0_7] : memref<3x128xf32, #tpu.memory_space<vmem>>, vector<1x128xf32>
    %c0_8 = arith.constant 0 : index
    %c0_9 = arith.constant 0 : index
    %7 = vector.load %arg4[%c0_8, %c0_9] : memref<128x128xbf16, #tpu.memory_space<vmem>>, vector<128x128xbf16>
    %8 = arith.extf %7 : vector<128x128xbf16> to vector<128x128xf32>
    %cst_10 = arith.constant dense<0.000000e+00> : vector<128xf32>
    %9 = vector.multi_reduction <add>, %3, %cst_10 [0] : vector<576x128xf32> to vector<128xf32>
    %10 = vector.shape_cast %9 : vector<128xf32> to vector<1x128xf32>
    %11 = arith.mulf %3, %3 : vector<576x128xf32>
    %cst_11 = arith.constant dense<0.000000e+00> : vector<128xf32>
    %12 = vector.multi_reduction <add>, %11, %cst_11 [0] : vector<576x128xf32> to vector<128xf32>
    %13 = vector.shape_cast %12 : vector<128xf32> to vector<1x128xf32>
    %cst_12 = arith.constant 5.760000e+02 : f32
    %14 = vector.broadcast %cst_12 : f32 to vector<1x128xf32>
    %15 = arith.mulf %14, %4 : vector<1x128xf32>
    %16 = arith.addf %10, %15 : vector<1x128xf32>
    %cst_13 = arith.constant 2.000000e+00 : f32
    %17 = vector.broadcast %cst_13 : f32 to vector<1x128xf32>
    %18 = arith.mulf %17, %4 : vector<1x128xf32>
    %19 = arith.mulf %18, %10 : vector<1x128xf32>
    %20 = arith.addf %13, %19 : vector<1x128xf32>
    %21 = arith.mulf %4, %4 : vector<1x128xf32>
    %cst_14 = arith.constant 5.760000e+02 : f32
    %22 = vector.broadcast %cst_14 : f32 to vector<1x128xf32>
    %23 = arith.mulf %22, %21 : vector<1x128xf32>
    %24 = arith.addf %20, %23 : vector<1x128xf32>
    %25 = tpu.concatenate %16, %24 in 0 : vector<1x128xf32>, vector<1x128xf32> -> vector<2x128xf32>
    %cst_15 = arith.constant dense<0.000000e+00> : vector<2x128xf32>
    %26 = tpu.matmul %25, %8, %cst_15 {dimension_numbers = #tpu.dot_dimension_numbers<[1], [0], [0], [1], [0, 0, 1, 1], [], []>} : vector<2x128xf32>, vector<128x128xf32>, vector<2x128xf32> -> vector<2x128xf32>
    %cst_16 = arith.constant 8.68055562E-4 : f32
    %27 = vector.broadcast %cst_16 : f32 to vector<2x128xf32>
    %28 = arith.mulf %26, %27 : vector<2x128xf32>
    %29 = vector.extract_strided_slice %28 {offsets = [0, 0], sizes = [1, 128], strides = [1, 1]} : vector<2x128xf32> to vector<1x128xf32>
    %30 = vector.extract_strided_slice %28 {offsets = [1, 0], sizes = [1, 128], strides = [1, 1]} : vector<2x128xf32> to vector<1x128xf32>
    %31 = arith.mulf %29, %29 : vector<1x128xf32>
    %32 = arith.subf %30, %31 : vector<1x128xf32>
    %cst_17 = arith.constant 9.99999974E-6 : f32
    %33 = vector.broadcast %cst_17 : f32 to vector<1x128xf32>
    %34 = arith.addf %32, %33 : vector<1x128xf32>
    %35 = math.rsqrt %34 : vector<1x128xf32>
    %36 = arith.mulf %5, %35 : vector<1x128xf32>
    %37 = arith.subf %4, %29 : vector<1x128xf32>
    %38 = arith.mulf %37, %36 : vector<1x128xf32>
    %39 = arith.addf %6, %38 : vector<1x128xf32>
    %40 = vector.broadcast %36 : vector<1x128xf32> to vector<576x128xf32>
    %41 = arith.mulf %3, %40 : vector<576x128xf32>
    %42 = vector.broadcast %39 : vector<1x128xf32> to vector<576x128xf32>
    %43 = arith.addf %41, %42 : vector<576x128xf32>
    %cst_18 = arith.constant 0.000000e+00 : f32
    %44 = vector.broadcast %cst_18 : f32 to vector<576x128xf32>
    %45 = arith.maximumf %43, %44 : vector<576x128xf32>
    %46 = arith.truncf %45 : vector<576x128xf32> to vector<576x128xbf16>
    %c0_19 = arith.constant 0 : index
    %c0_20 = arith.constant 0 : index
    %c0_21 = arith.constant 0 : index
    %47 = vector.load %arg5[%c0_19, %c0_20, %c0_21] : memref<1x576x128xbf16, #tpu.memory_space<vmem>>, vector<1x576x128xbf16>
    %48 = vector.shape_cast %47 : vector<1x576x128xbf16> to vector<576x128xbf16>
    %49 = vector.shape_cast %46 : vector<576x128xbf16> to vector<1x576x128xbf16>
    tpu.vector_store %arg5[%c0_19, %c0_20, %c0_21], %49 {strides = array<i32>} : memref<1x576x128xbf16, #tpu.memory_space<vmem>>, vector<1x576x128xbf16>,
    return
  }
  func.func @transform_0(%arg0: i32) -> (i32, i32, i32) {
    %c0_i32 = arith.constant 0 : i32
    %c0_i32_0 = arith.constant 0 : i32
    %c0_i32_1 = arith.constant 0 : i32
    return %arg0, %c0_i32, %c0_i32_0 : i32, i32, i32
  }
  func.func @transform_1(%arg0: i32) -> (i32, i32) {
    %c0_i32 = arith.constant 0 : i32
    %c0_i32_0 = arith.constant 0 : i32
    %c0_i32_1 = arith.constant 0 : i32
    return %c0_i32, %c0_i32_0 : i32, i32
  }
  func.func @transform_2(%arg0: i32) -> (i32, i32) {
    %c0_i32 = arith.constant 0 : i32
    %c0_i32_0 = arith.constant 0 : i32
    %c0_i32_1 = arith.constant 0 : i32
    return %c0_i32, %c0_i32_0 : i32, i32
  }
  func.func @transform_3(%arg0: i32) -> (i32, i32) {
    %c0_i32 = arith.constant 0 : i32
    %c0_i32_0 = arith.constant 0 : i32
    %c0_i32_1 = arith.constant 0 : i32
    return %c0_i32, %c0_i32_0 : i32, i32
  }
  func.func @transform_4(%arg0: i32) -> (i32, i32, i32) {
    %c0_i32 = arith.constant 0 : i32
    %c0_i32_0 = arith.constant 0 : i32
    %c0_i32_1 = arith.constant 0 : i32
    return %arg0, %c0_i32, %c0_i32_0 : i32, i32, i32
  }
}

</mosaic_0001>

<llo_original>
// kernel: tpu_custom_call.1
$region0: #{tpu_custom_call.1}
  #allocation0 [shape = 'u32[]', space=smem, size = 0x4, offset = 0x4, fixed_abs, tag = 'smem constant byte address 0x4 - core index']
  #allocation1 [shape = 'u32[144,128]{1,0:T(1,128)}', space=vmem, size = 0x12000, scoped, tag = 'internal scratch']
  %s0 = inlined_call_operand.hbm [shape: bf16[2,576,256], index: 0, kind: input, shape index: {}]
  %s1 = inlined_call_operand.hbm [shape: bf16[256,128], index: 1, kind: input, shape index: {}]
  %s2 = inlined_call_operand.hbm [shape: f32[3,128], index: 2, kind: input, shape index: {}]
  %s3 = inlined_call_operand.hbm [shape: bf16[128,128], index: 3, kind: input, shape index: {}]
  %s4 = inlined_call_operand.hbm [shape: bf16[2,576,128], index: 4, kind: output, shape index: {}]
  %s5 = sld [smem:[#allocation0]]
  $region65: #{tpu_custom_call.1} parent=0
    _
  %s7 = ssub.s32 1, %s5
  %s8 = scalar_select 0, %s7, %s5
  $region1: #{tpu_custom_call.1} parent=0
    #allocation2 [shape = 'u8[589824]{0}', space=vmem, size = 0x90000, scoped, tag = 'input window, operand 0']
    #allocation3 [shape = 's32[2]{0}', space=sflag, size = 0x8, scoped, tag = 'scoped memory for tpu_custom_call.1']
    #allocation4 [shape = 's32[2]{0}', space=sflag, size = 0x8, scoped, tag = 'scoped memory for tpu_custom_call.1']
    #allocation5 [shape = 'u8[65536]{0}', space=vmem, size = 0x10000, scoped, tag = 'input window, operand 1, single buffered']
    #allocation6 [shape = 's32[1]{0}', space=sflag, size = 0x4, scoped, tag = 'scoped memory for tpu_custom_call.1']
    #allocation7 [shape = 'u8[2048]{0}', space=vmem, size = 0x800, scoped, tag = 'input window, operand 2, single buffered']
    #allocation8 [shape = 'u8[32768]{0}', space=vmem, size = 0x8000, scoped, tag = 'input window, operand 3, single buffered']
    #allocation9 [shape = 's32[1]{0}', space=sflag, size = 0x4, scoped, tag = 'scoped memory for tpu_custom_call.1']
    #allocation10 [shape = 'u8[294912]{0}', space=vmem, size = 0x48000, scoped, tag = 'output window, operand 0']
    %9 = vsyncpa [#allocation3], 0
    %s10 = scalar_lea.sflag [#allocation3], 1
    %11 = vsyncpa %s10, 0
    %12 = vsyncpa [#allocation6], 0
    %13 = vsyncpa [#allocation9], 0
    %14 = vsyncpa [#allocation4], 0
    %s15 = scalar_lea.sflag [#allocation4], 1
    %16 = vsyncpa %s15, 0
    loop: start=0, step=1, limit=4
    $region2: #{tpu_custom_call.1} parent=1 // loop_pre_header
      _
    $region3: #{tpu_custom_call.1} parent=1 // loop_header
      %s18 = sphi 0, %s22
      %p19 = scmp.ge.s32.totalorder %s18, 4
      %s28 = sphi 0, %s30
      %s31 = sphi 0, %s28
      %s32 = sphi 0, %s31
      %s48 = sphi 0, %s32
      %s52 = sphi 0, %s52
      %s54 = sphi 0, %s52
      %s55 = sphi 0, %s54
      %s69 = sphi 0, %s55
      %s73 = sphi 0, %s73
      %s75 = sphi 0, %s73
      %s76 = sphi 0, %s75
      %s90 = sphi 0, %s76
      %s94 = sphi 0, %s94
      %s96 = sphi 0, %s94
      %s97 = sphi 0, %s96
      %s111 = sphi 0, %s97
      %s117 = sphi 0, %s119
      %s120 = sphi 0, %s117
      %s121 = sphi 0, %s120
      %s137 = sphi 0, %s121
    $region4: #{tpu_custom_call.1} parent=1 // loop_header_branch
      %21 = sbr.rel (%p19) target = $region8
    $region5: #{tpu_custom_call.1} parent=1 // loop_body
      %s23 = ssub.s32 %s18, 1
      %s24 = ssub.s32 %s18, 2
      %s25 = sadd.s32 %s18, 1
      %s26 = ssub.s32 %s18, %s25
      %p27 = scmp.eq.s32.totalorder %s26, 0
      %s29 = sadd.s32 %s28, 1
      %s30 = scalar_select %p27, %s28, %s29
      %p33 = pneg %p27
      %p34 = scmp.eq.s32.totalorder %s18, 1
      %p35 = por %p33, %p34
      %p36 = scmp.ne.s32.totalorder %s28, %s31
      %p37 = scmp.eq.s32.totalorder %s18, 0
      %p38 = por %p36, %p37
      %p39 = scmp.ne.s32.totalorder %s28, %s31
      %p40 = scmp.eq.s32.totalorder %s23, 1
      %p41 = por %p39, %p40
      %p42 = scmp.ne.s32.totalorder %s31, %s32
      %p43 = scmp.eq.s32.totalorder %s23, 0
      %p44 = por %p42, %p43
      %p45 = scmp.ne.s32.totalorder %s31, %s32
      %p46 = scmp.eq.s32.totalorder %s24, 1
      %p47 = por %p45, %p46
      %p49 = scmp.ne.s32.totalorder %s32, %s48
      %p50 = scmp.eq.s32.totalorder %s24, 0
      %p51 = por %p49, %p50
      %s53 = sadd.s32 %s52, 1
      %p56 = scmp.eq.s32.totalorder %s18, 1
      %p57 = scmp.ne.s32.totalorder %s52, %s54
      %p58 = scmp.eq.s32.totalorder %s18, 0
      %p59 = por %p57, %p58
      %p60 = scmp.ne.s32.totalorder %s52, %s54
      %p61 = scmp.eq.s32.totalorder %s23, 1
      %p62 = por %p60, %p61
      %p63 = scmp.ne.s32.totalorder %s54, %s55
      %p64 = scmp.eq.s32.totalorder %s23, 0
      %p65 = por %p63, %p64
      %p66 = scmp.ne.s32.totalorder %s54, %s55
      %p67 = scmp.eq.s32.totalorder %s24, 1
      %p68 = por %p66, %p67
      %p70 = scmp.ne.s32.totalorder %s55, %s69
      %p71 = scmp.eq.s32.totalorder %s24, 0
      %p72 = por %p70, %p71
      %s74 = sadd.s32 %s73, 1
      %p77 = scmp.eq.s32.totalorder %s18, 1
      %p78 = scmp.ne.s32.totalorder %s73, %s75
      %p79 = scmp.eq.s32.totalorder %s18, 0
      %p80 = por %p78, %p79
      %p81 = scmp.ne.s32.totalorder %s73, %s75
      %p82 = scmp.eq.s32.totalorder %s23, 1
      %p83 = por %p81, %p82
      %p84 = scmp.ne.s32.totalorder %s75, %s76
      %p85 = scmp.eq.s32.totalorder %s23, 0
      %p86 = por %p84, %p85
      %p87 = scmp.ne.s32.totalorder %s75, %s76
      %p88 = scmp.eq.s32.totalorder %s24, 1
      %p89 = por %p87, %p88
      %p91 = scmp.ne.s32.totalorder %s76, %s90
      %p92 = scmp.eq.s32.totalorder %s24, 0
      %p93 = por %p91, %p92
      %s95 = sadd.s32 %s94, 1
      %p98 = scmp.eq.s32.totalorder %s18, 1
      %p99 = scmp.ne.s32.totalorder %s94, %s96
      %p100 = scmp.eq.s32.totalorder %s18, 0
      %p101 = por %p99, %p100
      %p102 = scmp.ne.s32.totalorder %s94, %s96
      %p103 = scmp.eq.s32.totalorder %s23, 1
      %p104 = por %p102, %p103
      %p105 = scmp.ne.s32.totalorder %s96, %s97
      %p106 = scmp.eq.s32.totalorder %s23, 0
      %p107 = por %p105, %p106
      %p108 = scmp.ne.s32.totalorder %s96, %s97
      %p109 = scmp.eq.s32.totalorder %s24, 1
      %p110 = por %p108, %p109
      %p112 = scmp.ne.s32.totalorder %s97, %s111
      %p113 = scmp.eq.s32.totalorder %s24, 0
      %p114 = por %p112, %p113
      %s115 = ssub.s32 %s18, %s25
      %p116 = scmp.eq.s32.totalorder %s115, 0
      %s118 = sadd.s32 %s117, 1
      %s119 = scalar_select %p116, %s117, %s118
      %p122 = pneg %p116
      %p123 = scmp.eq.s32.totalorder %s18, 1
      %p124 = por %p122, %p123
      %p125 = scmp.ne.s32.totalorder %s117, %s120
      %p126 = scmp.eq.s32.totalorder %s18, 0
      %p127 = por %p125, %p126
      %p128 = scmp.ne.s32.totalorder %s117, %s120
      %p129 = scmp.eq.s32.totalorder %s23, 1
      %p130 = por %p128, %p129
      %p131 = scmp.ne.s32.totalorder %s120, %s121
      %p132 = scmp.eq.s32.totalorder %s23, 0
      %p133 = por %p131, %p132
      %p134 = scmp.ne.s32.totalorder %s120, %s121
      %p135 = scmp.eq.s32.totalorder %s24, 1
      %p136 = por %p134, %p135
      %p138 = scmp.ne.s32.totalorder %s121, %s137
      %p139 = scmp.eq.s32.totalorder %s24, 0
      %p140 = por %p138, %p139
      %p141 = scmp.le.s32.totalorder 1, %s18
      %p142 = scmp.lt.s32.totalorder %s18, 3
      %p143 = pnand %p141, %p142
      %p144 = pneg %p143
      // Predicated region
      $region9: #{tpu_custom_call.1} parent=5 // pred_check
        _
      $region10: #{tpu_custom_call.1} parent=5 // pred_check_branch
        %146 = sbr.rel (%p143) target = $region12
      $region11: #{tpu_custom_call.1} parent=5 // pred_region
        %s147 = ssub.s32 %s18, 1
        // Predicated region
        $region13: #{tpu_custom_call.1} parent=11 // pred_check
          %p148 = pneg %p65
        $region14: #{tpu_custom_call.1} parent=11 // pred_check_branch
          %150 = sbr.rel (%p148) target = $region16
        $region15: #{tpu_custom_call.1} parent=11 // pred_region
          %s152 = ssub.s32 2048, 2048
          %153 = vsyncadd [#allocation6], %s152
          %s154 = sshll.u32 [#allocation5], 4
          %s155 = int_to_ptr.vmem [resolvable:$true] %s154
          %160 = dma.hbm_to_vmem [thread:$0]  %s1, 2048, %s155, [#allocation6], 64, 64, 4
        $region16: #{tpu_custom_call.1} parent=11 // pred_fallthru
          _
        // Predicated region
        $region17: #{tpu_custom_call.1} parent=11 // pred_check
          %p161 = pneg %p86
        $region18: #{tpu_custom_call.1} parent=11 // pred_check_branch
          %163 = sbr.rel (%p161) target = $region20
        $region19: #{tpu_custom_call.1} parent=11 // pred_region
          %s165 = ssub.s32 64, 64
          %166 = vsyncadd [#allocation6], %s165
          %s168 = sshll.u32 [#allocation7], 4
          %s169 = int_to_ptr.vmem [resolvable:$true] %s168
          %171 = dma.hbm_to_vmem [thread:$0]  %s2, 64, %s169, [#allocation6]
        $region20: #{tpu_custom_call.1} parent=11 // pred_fallthru
          _
        // Predicated region
        $region21: #{tpu_custom_call.1} parent=11 // pred_check
          %p172 = pneg %p107
        $region22: #{tpu_custom_call.1} parent=11 // pred_check_branch
          %174 = sbr.rel (%p172) target = $region24
        $region23: #{tpu_custom_call.1} parent=11 // pred_region
          %s176 = ssub.s32 1024, 1024
          %177 = vsyncadd [#allocation9], %s176
          %s178 = sshll.u32 [#allocation8], 4
          %s179 = int_to_ptr.vmem [resolvable:$true] %s178
          %184 = dma.hbm_to_vmem [thread:$0]  %s3, 1024, %s179, [#allocation9], 64, 64, 4
        $region24: #{tpu_custom_call.1} parent=11 // pred_fallthru
          _
      $region12: #{tpu_custom_call.1} parent=5 // pred_fallthru
        _
      %p185 = scmp.lt.s32.totalorder %s18, 2
      // Predicated region
      $region25: #{tpu_custom_call.1} parent=5 // pred_check
        %p186 = pneg %p185
      $region26: #{tpu_custom_call.1} parent=5 // pred_check_branch
        %188 = sbr.rel (%p186) target = $region28
      $region27: #{tpu_custom_call.1} parent=5 // pred_region
        // Predicated region
        $region29: #{tpu_custom_call.1} parent=27 // pred_check
          %p189 = pneg %p38
        $region30: #{tpu_custom_call.1} parent=27 // pred_check_branch
          %191 = sbr.rel (%p189) target = $region32
        $region31: #{tpu_custom_call.1} parent=27 // pred_region
          %s192 = sand.u32 %s28, 1
          %s193 = scalar_lea.sflag [#allocation3], %s192
          %s194 = sand.u32 %s28, 1
          %s195 = smul.addr %s194, 576
          %s196 = scalar_lea.vmem [#allocation2], %s195
          %s198 = ssub.s32 9216, 9216
          %199 = vsyncadd %s193, %s198
          %s200 = smul.addr %s18, 144
          %s201 = smul.addr %s200, 64
          %s202 = scalar_lea.hbm %s0, %s201
          %s203 = sshll.u32 %s196, 4
          %s204 = int_to_ptr.vmem [resolvable:$true] %s203
          %209 = dma.hbm_to_vmem [thread:$0]  %s202, 9216, %s204, %s193, 128, 128, 8
        $region32: #{tpu_custom_call.1} parent=27 // pred_fallthru
          _
      $region28: #{tpu_custom_call.1} parent=5 // pred_fallthru
        _
      %p210 = scmp.le.s32.totalorder 1, %s18
      %p211 = scmp.lt.s32.totalorder %s18, 3
      %p212 = pnand %p210, %p211
      %p213 = pneg %p212
      // Predicated region
      $region33: #{tpu_custom_call.1} parent=5 // pred_check
        _
      $region34: #{tpu_custom_call.1} parent=5 // pred_check_branch
        %215 = sbr.rel (%p212) target = $region36
      $region35: #{tpu_custom_call.1} parent=5 // pred_region
        %s216 = ssub.s32 %s18, 1
        %s217 = sand.u32 %s31, 1
        %s218 = scalar_lea.sflag [#allocation3], %s217
        %s219 = sand.u32 %s31, 1
        %s220 = smul.addr %s219, 576
        %s221 = scalar_lea.vmem [#allocation2], %s220
        // Predicated region
        $region37: #{tpu_custom_call.1} parent=35 // pred_check
          %p222 = pneg %p44
        $region38: #{tpu_custom_call.1} parent=35 // pred_check_branch
          %224 = sbr.rel (%p222) target = $region40
        $region39: #{tpu_custom_call.1} parent=35 // pred_region
          %225 = dma.done %s218, 9216
        $region40: #{tpu_custom_call.1} parent=35 // pred_fallthru
          _
        // Predicated region
        $region41: #{tpu_custom_call.1} parent=35 // pred_check
          %p226 = pneg %p65
        $region42: #{tpu_custom_call.1} parent=35 // pred_check_branch
          %228 = sbr.rel (%p226) target = $region44
        $region43: #{tpu_custom_call.1} parent=35 // pred_region
          %229 = dma.done [#allocation6], 2048
        $region44: #{tpu_custom_call.1} parent=35 // pred_fallthru
          _
        // Predicated region
        $region45: #{tpu_custom_call.1} parent=35 // pred_check
          %p230 = pneg %p86
        $region46: #{tpu_custom_call.1} parent=35 // pred_check_branch
          %232 = sbr.rel (%p230) target = $region48
        $region47: #{tpu_custom_call.1} parent=35 // pred_region
          %233 = dma.done [#allocation6], 64
        $region48: #{tpu_custom_call.1} parent=35 // pred_fallthru
          _
        // Predicated region
        $region49: #{tpu_custom_call.1} parent=35 // pred_check
          %p234 = pneg %p107
        $region50: #{tpu_custom_call.1} parent=35 // pred_check_branch
          %236 = sbr.rel (%p234) target = $region52
        $region51: #{tpu_custom_call.1} parent=35 // pred_region
          %237 = dma.done [#allocation9], 1024
        $region52: #{tpu_custom_call.1} parent=35 // pred_fallthru
          _
        %s238 = sand.u32 %s31, 1
        %s239 = scalar_lea.sflag [#allocation3], %s238
        %s240 = sand.u32 %s31, 1
        %s241 = smul.addr %s240, 576
        %s242 = scalar_lea.vmem [#allocation2], %s241
        %p243 = pneg %p44
        %p244 = pneg %p41
        %p245 = pneg %p65
        %p246 = pneg %p62
        %p247 = pneg %p86
        %p248 = pneg %p83
        %p249 = pneg %p107
        %p250 = pneg %p104
        %p251 = pneg %p133
        %p252 = pneg %p130
        %s253 = sand.u32 %s120, 1
        %s254 = scalar_lea.sflag [#allocation4], %s253
        %s255 = sand.u32 %s120, 1
        %s256 = smul.addr %s255, 288
        %s257 = scalar_lea.vmem [#allocation10], %s256
        %v259 = vld [vmem:[%s221] sm:$0xff]
        %v260 = vld [vmem:[%s221 + $0x8] sm:$0xff]
        %v261 = vld [vmem:[%s221 + $0x10] sm:$0xff]
        %v262 = vld [vmem:[%s221 + $0x18] sm:$0xff]
        %v263 = vld [vmem:[%s221 + $0x20] sm:$0xff]
        %v264 = vld [vmem:[%s221 + $0x28] sm:$0xff]
        %v265 = vld [vmem:[%s221 + $0x30] sm:$0xff]
        %v266 = vld [vmem:[%s221 + $0x38] sm:$0xff]
        %v267 = vld [vmem:[%s221 + $0x40] sm:$0xff]
        %v268 = vld [vmem:[%s221 + $0x48] sm:$0xff]
        %v269 = vld [vmem:[%s221 + $0x50] sm:$0xff]
        %v270 = vld [vmem:[%s221 + $0x58] sm:$0xff]
        %v271 = vld [vmem:[%s221 + $0x60] sm:$0xff]
        %v272 = vld [vmem:[%s221 + $0x68] sm:$0xff]
        %v273 = vld [vmem:[%s221 + $0x70] sm:$0xff]
        %v274 = vld [vmem:[%s221 + $0x78] sm:$0xff]
        %v275 = vld [vmem:[%s221 + $0x80] sm:$0xff]
        %v276 = vld [vmem:[%s221 + $0x88] sm:$0xff]
        %v277 = vld [vmem:[%s221 + $0x90] sm:$0xff]
        %v278 = vld [vmem:[%s221 + $0x98] sm:$0xff]
        %v279 = vld [vmem:[%s221 + $0xa0] sm:$0xff]
        %v280 = vld [vmem:[%s221 + $0xa8] sm:$0xff]
        %v281 = vld [vmem:[%s221 + $0xb0] sm:$0xff]
        %v282 = vld [vmem:[%s221 + $0xb8] sm:$0xff]
        %v283 = vld [vmem:[%s221 + $0xc0] sm:$0xff]
        %v284 = vld [vmem:[%s221 + $0xc8] sm:$0xff]
        %v285 = vld [vmem:[%s221 + $0xd0] sm:$0xff]
        %v286 = vld [vmem:[%s221 + $0xd8] sm:$0xff]
        %v287 = vld [vmem:[%s221 + $0xe0] sm:$0xff]
        %v288 = vld [vmem:[%s221 + $0xe8] sm:$0xff]
        %v289 = vld [vmem:[%s221 + $0xf0] sm:$0xff]
        %v290 = vld [vmem:[%s221 + $0xf8] sm:$0xff]
        %v291 = vld [vmem:[%s221 + $0x100] sm:$0xff]
        %v292 = vld [vmem:[%s221 + $0x108] sm:$0xff]
        %v293 = vld [vmem:[%s221 + $0x110] sm:$0xff]
        %v294 = vld [vmem:[%s221 + $0x118] sm:$0xff]
        %v295 = vld [vmem:[%s221 + $0x120] sm:$0xff]
        %v296 = vld [vmem:[%s221 + $0x128] sm:$0xff]
        %v297 = vld [vmem:[%s221 + $0x130] sm:$0xff]
        %v298 = vld [vmem:[%s221 + $0x138] sm:$0xff]
        %v299 = vld [vmem:[%s221 + $0x140] sm:$0xff]
        %v300 = vld [vmem:[%s221 + $0x148] sm:$0xff]
        %v301 = vld [vmem:[%s221 + $0x150] sm:$0xff]
        %v302 = vld [vmem:[%s221 + $0x158] sm:$0xff]
        %v303 = vld [vmem:[%s221 + $0x160] sm:$0xff]
        %v304 = vld [vmem:[%s221 + $0x168] sm:$0xff]
        %v305 = vld [vmem:[%s221 + $0x170] sm:$0xff]
        %v306 = vld [vmem:[%s221 + $0x178] sm:$0xff]
        %v307 = vld [vmem:[%s221 + $0x180] sm:$0xff]
        %v308 = vld [vmem:[%s221 + $0x188] sm:$0xff]
        %v309 = vld [vmem:[%s221 + $0x190] sm:$0xff]
        %v310 = vld [vmem:[%s221 + $0x198] sm:$0xff]
        %v311 = vld [vmem:[%s221 + $0x1a0] sm:$0xff]
        %v312 = vld [vmem:[%s221 + $0x1a8] sm:$0xff]
        %v313 = vld [vmem:[%s221 + $0x1b0] sm:$0xff]
        %v314 = vld [vmem:[%s221 + $0x1b8] sm:$0xff]
        %v315 = vld [vmem:[%s221 + $0x1c0] sm:$0xff]
        %v316 = vld [vmem:[%s221 + $0x1c8] sm:$0xff]
        %v317 = vld [vmem:[%s221 + $0x1d0] sm:$0xff]
        %v318 = vld [vmem:[%s221 + $0x1d8] sm:$0xff]
        %v319 = vld [vmem:[%s221 + $0x1e0] sm:$0xff]
        %v320 = vld [vmem:[%s221 + $0x1e8] sm:$0xff]
        %v321 = vld [vmem:[%s221 + $0x1f0] sm:$0xff]
        %v322 = vld [vmem:[%s221 + $0x1f8] sm:$0xff]
        %v323 = vld [vmem:[%s221 + $0x200] sm:$0xff]
        %v324 = vld [vmem:[%s221 + $0x208] sm:$0xff]
        %v325 = vld [vmem:[%s221 + $0x210] sm:$0xff]
        %v326 = vld [vmem:[%s221 + $0x218] sm:$0xff]
        %v327 = vld [vmem:[%s221 + $0x220] sm:$0xff]
        %v328 = vld [vmem:[%s221 + $0x228] sm:$0xff]
        %v329 = vld [vmem:[%s221 + $0x230] sm:$0xff]
        %v330 = vld [vmem:[%s221 + $0x238] sm:$0xff]
        %v331 = vld [vmem:[#allocation5] sm:$0xf]
        %v332 = vld [vmem:[#allocation5 + $0x4] sm:$0xf]
        %v333 = vld [vmem:[#allocation5 + $0x8] sm:$0xf]
        %v334 = vld [vmem:[#allocation5 + $0xc] sm:$0xf]
        %v335 = vld [vmem:[#allocation5 + $0x10] sm:$0xf]
        %v336 = vld [vmem:[#allocation5 + $0x14] sm:$0xf]
        %v337 = vld [vmem:[#allocation5 + $0x18] sm:$0xf]
        %v338 = vld [vmem:[#allocation5 + $0x1c] sm:$0xf]
        %v339 = vld [vmem:[#allocation5 + $0x20] sm:$0xf]
        %v340 = vld [vmem:[#allocation5 + $0x24] sm:$0xf]
        %v341 = vld [vmem:[#allocation5 + $0x28] sm:$0xf]
        %v342 = vld [vmem:[#allocation5 + $0x2c] sm:$0xf]
        %v343 = vld [vmem:[#allocation5 + $0x30] sm:$0xf]
        %v344 = vld [vmem:[#allocation5 + $0x34] sm:$0xf]
        %v345 = vld [vmem:[#allocation5 + $0x38] sm:$0xf]
        %v346 = vld [vmem:[#allocation5 + $0x3c] sm:$0xf]
        %v347 = vld [vmem:[#allocation5 + $0x40] sm:$0xf]
        %v348 = vld [vmem:[#allocation5 + $0x44] sm:$0xf]
        %v349 = vld [vmem:[#allocation5 + $0x48] sm:$0xf]
        %v350 = vld [vmem:[#allocation5 + $0x4c] sm:$0xf]
        %v351 = vld [vmem:[#allocation5 + $0x50] sm:$0xf]
        %v352 = vld [vmem:[#allocation5 + $0x54] sm:$0xf]
        %v353 = vld [vmem:[#allocation5 + $0x58] sm:$0xf]
        %v354 = vld [vmem:[#allocation5 + $0x5c] sm:$0xf]
        %v355 = vld [vmem:[#allocation5 + $0x60] sm:$0xf]
        %v356 = vld [vmem:[#allocation5 + $0x64] sm:$0xf]
        %v357 = vld [vmem:[#allocation5 + $0x68] sm:$0xf]
        %v358 = vld [vmem:[#allocation5 + $0x6c] sm:$0xf]
        %v359 = vld [vmem:[#allocation5 + $0x70] sm:$0xf]
        %v360 = vld [vmem:[#allocation5 + $0x74] sm:$0xf]
        %v361 = vld [vmem:[#allocation5 + $0x78] sm:$0xf]
        %v362 = vld [vmem:[#allocation5 + $0x7c] sm:$0xf]
        %v435 = vunpack.c.l.b16 %v259
        %v436 = vunpack.c.h.b16 %v259
        %v437 = vunpack.c.l.b16 %v260
        %v438 = vunpack.c.h.b16 %v260
        %v439 = vunpack.c.l.b16 %v261
        %v440 = vunpack.c.h.b16 %v261
        %v441 = vunpack.c.l.b16 %v262
        %v442 = vunpack.c.h.b16 %v262
        %v443 = vunpack.c.l.b16 %v263
        %v444 = vunpack.c.h.b16 %v263
        %v445 = vunpack.c.l.b16 %v264
        %v446 = vunpack.c.h.b16 %v264
        %v447 = vunpack.c.l.b16 %v265
        %v448 = vunpack.c.h.b16 %v265
        %v449 = vunpack.c.l.b16 %v266
        %v450 = vunpack.c.h.b16 %v266
        %v451 = vunpack.c.l.b16 %v267
        %v452 = vunpack.c.h.b16 %v267
        %v453 = vunpack.c.l.b16 %v268
        %v454 = vunpack.c.h.b16 %v268
        %v455 = vunpack.c.l.b16 %v269
        %v456 = vunpack.c.h.b16 %v269
        %v457 = vunpack.c.l.b16 %v270
        %v458 = vunpack.c.h.b16 %v270
        %v459 = vunpack.c.l.b16 %v271
        %v460 = vunpack.c.h.b16 %v271
        %v461 = vunpack.c.l.b16 %v272
        %v462 = vunpack.c.h.b16 %v272
        %v463 = vunpack.c.l.b16 %v273
        %v464 = vunpack.c.h.b16 %v273
        %v465 = vunpack.c.l.b16 %v274
        %v466 = vunpack.c.h.b16 %v274
        %v467 = vunpack.c.l.b16 %v275
        %v468 = vunpack.c.h.b16 %v275
        %v469 = vunpack.c.l.b16 %v276
        %v470 = vunpack.c.h.b16 %v276
        %v471 = vunpack.c.l.b16 %v277
        %v472 = vunpack.c.h.b16 %v277
        %v473 = vunpack.c.l.b16 %v278
        %v474 = vunpack.c.h.b16 %v278
        %v475 = vunpack.c.l.b16 %v279
        %v476 = vunpack.c.h.b16 %v279
        %v477 = vunpack.c.l.b16 %v280
        %v478 = vunpack.c.h.b16 %v280
        %v479 = vunpack.c.l.b16 %v281
        %v480 = vunpack.c.h.b16 %v281
        %v481 = vunpack.c.l.b16 %v282
        %v482 = vunpack.c.h.b16 %v282
        %v483 = vunpack.c.l.b16 %v283
        %v484 = vunpack.c.h.b16 %v283
        %v485 = vunpack.c.l.b16 %v284
        %v486 = vunpack.c.h.b16 %v284
        %v487 = vunpack.c.l.b16 %v285
        %v488 = vunpack.c.h.b16 %v285
        %v489 = vunpack.c.l.b16 %v286
        %v490 = vunpack.c.h.b16 %v286
        %v491 = vunpack.c.l.b16 %v287
        %v492 = vunpack.c.h.b16 %v287
        %v493 = vunpack.c.l.b16 %v288
        %v494 = vunpack.c.h.b16 %v288
        %v495 = vunpack.c.l.b16 %v289
        %v496 = vunpack.c.h.b16 %v289
        %v497 = vunpack.c.l.b16 %v290
        %v498 = vunpack.c.h.b16 %v290
        %v499 = vunpack.c.l.b16 %v291
        %v500 = vunpack.c.h.b16 %v291
        %v501 = vunpack.c.l.b16 %v292
        %v502 = vunpack.c.h.b16 %v292
        %v503 = vunpack.c.l.b16 %v293
        %v504 = vunpack.c.h.b16 %v293
        %v505 = vunpack.c.l.b16 %v294
        %v506 = vunpack.c.h.b16 %v294
        %v507 = vunpack.c.l.b16 %v295
        %v508 = vunpack.c.h.b16 %v295
        %v509 = vunpack.c.l.b16 %v296
        %v510 = vunpack.c.h.b16 %v296
        %v511 = vunpack.c.l.b16 %v297
        %v512 = vunpack.c.h.b16 %v297
        %v513 = vunpack.c.l.b16 %v298
        %v514 = vunpack.c.h.b16 %v298
        %v515 = vunpack.c.l.b16 %v299
        %v516 = vunpack.c.h.b16 %v299
        %v517 = vunpack.c.l.b16 %v300
        %v518 = vunpack.c.h.b16 %v300
        %v519 = vunpack.c.l.b16 %v301
        %v520 = vunpack.c.h.b16 %v301
        %v521 = vunpack.c.l.b16 %v302
        %v522 = vunpack.c.h.b16 %v302
        %v523 = vunpack.c.l.b16 %v303
        %v524 = vunpack.c.h.b16 %v303
        %v525 = vunpack.c.l.b16 %v304
        %v526 = vunpack.c.h.b16 %v304
        %v527 = vunpack.c.l.b16 %v305
        %v528 = vunpack.c.h.b16 %v305
        %v529 = vunpack.c.l.b16 %v306
        %v530 = vunpack.c.h.b16 %v306
        %v531 = vunpack.c.l.b16 %v307
        %v532 = vunpack.c.h.b16 %v307
        %v533 = vunpack.c.l.b16 %v308
        %v534 = vunpack.c.h.b16 %v308
        %v535 = vunpack.c.l.b16 %v309
        %v536 = vunpack.c.h.b16 %v309
        %v537 = vunpack.c.l.b16 %v310
        %v538 = vunpack.c.h.b16 %v310
        %v539 = vunpack.c.l.b16 %v311
        %v540 = vunpack.c.h.b16 %v311
        %v541 = vunpack.c.l.b16 %v312
        %v542 = vunpack.c.h.b16 %v312
        %v543 = vunpack.c.l.b16 %v313
        %v544 = vunpack.c.h.b16 %v313
        %v545 = vunpack.c.l.b16 %v314
        %v546 = vunpack.c.h.b16 %v314
        %v547 = vunpack.c.l.b16 %v315
        %v548 = vunpack.c.h.b16 %v315
        %v549 = vunpack.c.l.b16 %v316
        %v550 = vunpack.c.h.b16 %v316
        %v551 = vunpack.c.l.b16 %v317
        %v552 = vunpack.c.h.b16 %v317
        %v553 = vunpack.c.l.b16 %v318
        %v554 = vunpack.c.h.b16 %v318
        %v555 = vunpack.c.l.b16 %v319
        %v556 = vunpack.c.h.b16 %v319
        %v557 = vunpack.c.l.b16 %v320
        %v558 = vunpack.c.h.b16 %v320
        %v559 = vunpack.c.l.b16 %v321
        %v560 = vunpack.c.h.b16 %v321
        %v561 = vunpack.c.l.b16 %v322
        %v562 = vunpack.c.h.b16 %v322
        %v563 = vunpack.c.l.b16 %v323
        %v564 = vunpack.c.h.b16 %v323
        %v565 = vunpack.c.l.b16 %v324
        %v566 = vunpack.c.h.b16 %v324
        %v567 = vunpack.c.l.b16 %v325
        %v568 = vunpack.c.h.b16 %v325
        %v569 = vunpack.c.l.b16 %v326
        %v570 = vunpack.c.h.b16 %v326
        %v571 = vunpack.c.l.b16 %v327
        %v572 = vunpack.c.h.b16 %v327
        %v573 = vunpack.c.l.b16 %v328
        %v574 = vunpack.c.h.b16 %v328
        %v575 = vunpack.c.l.b16 %v329
        %v576 = vunpack.c.h.b16 %v329
        %v577 = vunpack.c.l.b16 %v330
        %v578 = vunpack.c.h.b16 %v330
        %v579 = vpack.c.b16 %v437, %v435
        %v580 = vpack.c.b16 %v438, %v436
        %v581 = vpack.c.b16 %v441, %v439
        %v582 = vpack.c.b16 %v442, %v440
        %v583 = vpack.c.b16 %v445, %v443
        %v584 = vpack.c.b16 %v446, %v444
        %v585 = vpack.c.b16 %v449, %v447
        %v586 = vpack.c.b16 %v450, %v448
        %v587 = vpack.c.b16 %v453, %v451
        %v588 = vpack.c.b16 %v454, %v452
        %v589 = vpack.c.b16 %v457, %v455
        %v590 = vpack.c.b16 %v458, %v456
        %v591 = vpack.c.b16 %v461, %v459
        %v592 = vpack.c.b16 %v462, %v460
        %v593 = vpack.c.b16 %v465, %v463
        %v594 = vpack.c.b16 %v466, %v464
        %v595 = vpack.c.b16 %v469, %v467
        %v596 = vpack.c.b16 %v470, %v468
        %v597 = vpack.c.b16 %v473, %v471
        %v598 = vpack.c.b16 %v474, %v472
        %v599 = vpack.c.b16 %v477, %v475
        %v600 = vpack.c.b16 %v478, %v476
        %v601 = vpack.c.b16 %v481, %v479
        %v602 = vpack.c.b16 %v482, %v480
        %v603 = vpack.c.b16 %v485, %v483
        %v604 = vpack.c.b16 %v486, %v484
        %v605 = vpack.c.b16 %v489, %v487
        %v606 = vpack.c.b16 %v490, %v488
        %v607 = vpack.c.b16 %v493, %v491
        %v608 = vpack.c.b16 %v494, %v492
        %v609 = vpack.c.b16 %v497, %v495
        %v610 = vpack.c.b16 %v498, %v496
        %v611 = vpack.c.b16 %v501, %v499
        %v612 = vpack.c.b16 %v502, %v500
        %v613 = vpack.c.b16 %v505, %v503
        %v614 = vpack.c.b16 %v506, %v504
        %v615 = vpack.c.b16 %v509, %v507
        %v616 = vpack.c.b16 %v510, %v508
        %v617 = vpack.c.b16 %v513, %v511
        %v618 = vpack.c.b16 %v514, %v512
        %v619 = vpack.c.b16 %v517, %v515
        %v620 = vpack.c.b16 %v518, %v516
        %v621 = vpack.c.b16 %v521, %v519
        %v622 = vpack.c.b16 %v522, %v520
        %v623 = vpack.c.b16 %v525, %v523
        %v624 = vpack.c.b16 %v526, %v524
        %v625 = vpack.c.b16 %v529, %v527
        %v626 = vpack.c.b16 %v530, %v528
        %v627 = vpack.c.b16 %v533, %v531
        %v628 = vpack.c.b16 %v534, %v532
        %v629 = vpack.c.b16 %v537, %v535
        %v630 = vpack.c.b16 %v538, %v536
        %v631 = vpack.c.b16 %v541, %v539
        %v632 = vpack.c.b16 %v542, %v540
        %v633 = vpack.c.b16 %v545, %v543
        %v634 = vpack.c.b16 %v546, %v544
        %v635 = vpack.c.b16 %v549, %v547
        %v636 = vpack.c.b16 %v550, %v548
        %v637 = vpack.c.b16 %v553, %v551
        %v638 = vpack.c.b16 %v554, %v552
        %v639 = vpack.c.b16 %v557, %v555
        %v640 = vpack.c.b16 %v558, %v556
        %v641 = vpack.c.b16 %v561, %v559
        %v642 = vpack.c.b16 %v562, %v560
        %v643 = vpack.c.b16 %v565, %v563
        %v644 = vpack.c.b16 %v566, %v564
        %v645 = vpack.c.b16 %v569, %v567
        %v646 = vpack.c.b16 %v570, %v568
        %v647 = vpack.c.b16 %v573, %v571
        %v648 = vpack.c.b16 %v574, %v572
        %v649 = vpack.c.b16 %v577, %v575
        %v650 = vpack.c.b16 %v578, %v576
        %v755 = vunpack.c.l.b16 %v331
        %v756 = vunpack.c.l.b16 %v332
        %v757 = vunpack.c.l.b16 %v333
        %v758 = vunpack.c.l.b16 %v334
        %v759 = vunpack.c.l.b16 %v335
        %v760 = vunpack.c.l.b16 %v336
        %v761 = vunpack.c.l.b16 %v337
        %v762 = vunpack.c.l.b16 %v338
        %v763 = vunpack.c.l.b16 %v339
        %v764 = vunpack.c.l.b16 %v340
        %v765 = vunpack.c.l.b16 %v341
        %v766 = vunpack.c.l.b16 %v342
        %v767 = vunpack.c.l.b16 %v343
        %v768 = vunpack.c.l.b16 %v344
        %v769 = vunpack.c.l.b16 %v345
        %v770 = vunpack.c.l.b16 %v346
        %v771 = vunpack.c.l.b16 %v347
        %v772 = vunpack.c.l.b16 %v348
        %v773 = vunpack.c.l.b16 %v349
        %v774 = vunpack.c.l.b16 %v350
        %v775 = vunpack.c.l.b16 %v351
        %v776 = vunpack.c.l.b16 %v352
        %v777 = vunpack.c.l.b16 %v353
        %v778 = vunpack.c.l.b16 %v354
        %v779 = vunpack.c.l.b16 %v355
        %v780 = vunpack.c.l.b16 %v356
        %v781 = vunpack.c.l.b16 %v357
        %v782 = vunpack.c.l.b16 %v358
        %v783 = vunpack.c.l.b16 %v359
        %v784 = vunpack.c.l.b16 %v360
        %v785 = vunpack.c.l.b16 %v361
        %v786 = vunpack.c.l.b16 %v362
        %v787 = vpack.c.b16 %v756, %v755
        %v788 = vpack.c.b16 %v758, %v757
        %v789 = vpack.c.b16 %v760, %v759
        %v790 = vpack.c.b16 %v762, %v761
        %v791 = vpack.c.b16 %v764, %v763
        %v792 = vpack.c.b16 %v766, %v765
        %v793 = vpack.c.b16 %v768, %v767
        %v794 = vpack.c.b16 %v770, %v769
        %v795 = vpack.c.b16 %v772, %v771
        %v796 = vpack.c.b16 %v774, %v773
        %v797 = vpack.c.b16 %v776, %v775
        %v798 = vpack.c.b16 %v778, %v777
        %v799 = vpack.c.b16 %v780, %v779
        %v800 = vpack.c.b16 %v782, %v781
        %v801 = vpack.c.b16 %v784, %v783
        %v802 = vpack.c.b16 %v786, %v785
        %819 = vmatprep.subr.bf16.mxu0 0
        %820 = vmatpush1.bf16.msra.mxu0 %v794
        %821 = vmatprep.subr.bf16.mxu0 0
        %822 = vmatpush1.bf16.msra.mxu0 %v793
        %823 = vmatprep.subr.bf16.mxu0 0
        %824 = vmatpush1.bf16.msra.mxu0 %v792
        %825 = vmatprep.subr.bf16.mxu0 0
        %826 = vmatpush1.bf16.msra.mxu0 %v791
        %827 = vmatprep.subr.bf16.mxu0 0
        %828 = vmatpush1.bf16.msra.mxu0 %v790
        %829 = vmatprep.subr.bf16.mxu0 0
        %830 = vmatpush1.bf16.msra.mxu0 %v789
        %831 = vmatprep.subr.bf16.mxu0 0
        %832 = vmatpush1.bf16.msra.mxu0 %v788
        %833 = vmatprep.subr.bf16.mxu0 0
        %834 = vmatpush1.bf16.msra.mxu0 %v787
        %835 = vmatprep.subr.bf16.mxu0 0
        %836 = vmatpush2.bf16.msra.mxu0 %v802
        %837 = vmatprep.subr.bf16.mxu0 0
        %838 = vmatpush2.bf16.msra.mxu0 %v801
        %839 = vmatprep.subr.bf16.mxu0 0
        %840 = vmatpush2.bf16.msra.mxu0 %v800
        %841 = vmatprep.subr.bf16.mxu0 0
        %842 = vmatpush2.bf16.msra.mxu0 %v799
        %843 = vmatprep.subr.bf16.mxu0 0
        %844 = vmatpush2.bf16.msra.mxu0 %v798
        %845 = vmatprep.subr.bf16.mxu0 0
        %846 = vmatpush2.bf16.msra.mxu0 %v797
        %847 = vmatprep.subr.bf16.mxu0 0
        %848 = vmatpush2.bf16.msra.mxu0 %v796
        %849 = vmatprep.subr.bf16.mxu0 0
        %850 = vmatpush2.bf16.msra.mxu0 %v795
        %851 = vmatprep.mubr.bf16.mxu0 %v580
        %852 = vmatmul.mubr.bf16.gmra.mxu0 %v579
        %v853 = vpop.f32.mrf.mxu0
        %v854 = vadd.f32 0.0, %v853
        %v855 = vpop.f32.mrf.mxu0
        %v856 = vpop.f32.mrf.mxu0
        %v857 = vadd.f32 0.0, %v856
        %v858 = vpop.f32.mrf.mxu0
        %859 = vmatprep.mubr.bf16.mxu0 %v582
        %860 = vmatmul.mubr.bf16.gmra.mxu0 %v581
        %v861 = vpop.f32.mrf.mxu0
        %v862 = vadd.f32 0.0, %v861
        %v863 = vpop.f32.mrf.mxu0
        %v864 = vpop.f32.mrf.mxu0
        %v865 = vadd.f32 0.0, %v864
        %v866 = vpop.f32.mrf.mxu0
        %867 = vmatprep.mubr.bf16.mxu0 %v584
        %868 = vmatmul.mubr.bf16.gmra.mxu0 %v583
        %v869 = vpop.f32.mrf.mxu0
        %v870 = vadd.f32 0.0, %v869
        %v871 = vpop.f32.mrf.mxu0
        %v872 = vpop.f32.mrf.mxu0
        %v873 = vadd.f32 0.0, %v872
        %v874 = vpop.f32.mrf.mxu0
        %875 = vmatprep.mubr.bf16.mxu0 %v586
        %876 = vmatmul.mubr.bf16.gmra.mxu0 %v585
        %v877 = vpop.f32.mrf.mxu0
        %v878 = vadd.f32 0.0, %v877
        %v879 = vpop.f32.mrf.mxu0
        %v880 = vpop.f32.mrf.mxu0
        %v881 = vadd.f32 0.0, %v880
        %v882 = vpop.f32.mrf.mxu0
        %883 = vmatprep.mubr.bf16.mxu0 %v588
        %884 = vmatmul.mubr.bf16.gmra.mxu0 %v587
        %v885 = vpop.f32.mrf.mxu0
        %v886 = vadd.f32 0.0, %v885
        %v887 = vpop.f32.mrf.mxu0
        %v888 = vpop.f32.mrf.mxu0
        %v889 = vadd.f32 0.0, %v888
        %v890 = vpop.f32.mrf.mxu0
        %891 = vmatprep.mubr.bf16.mxu0 %v590
        %892 = vmatmul.mubr.bf16.gmra.mxu0 %v589
        %v893 = vpop.f32.mrf.mxu0
        %v894 = vadd.f32 0.0, %v893
        %v895 = vpop.f32.mrf.mxu0
        %v896 = vpop.f32.mrf.mxu0
        %v897 = vadd.f32 0.0, %v896
        %v898 = vpop.f32.mrf.mxu0
        %899 = vmatprep.mubr.bf16.mxu0 %v592
        %900 = vmatmul.mubr.bf16.gmra.mxu0 %v591
        %v901 = vpop.f32.mrf.mxu0
        %v902 = vadd.f32 0.0, %v901
        %v903 = vpop.f32.mrf.mxu0
        %v904 = vpop.f32.mrf.mxu0
        %v905 = vadd.f32 0.0, %v904
        %v906 = vpop.f32.mrf.mxu0
        %907 = vmatprep.mubr.bf16.mxu0 %v594
        %908 = vmatmul.mubr.bf16.gmra.mxu0 %v593
        %v909 = vpop.f32.mrf.mxu0
        %v910 = vadd.f32 0.0, %v909
        %v911 = vpop.f32.mrf.mxu0
        %v912 = vpop.f32.mrf.mxu0
        %v913 = vadd.f32 0.0, %v912
        %v914 = vpop.f32.mrf.mxu0
        %915 = vmatprep.mubr.bf16.mxu0 %v596
        %916 = vmatmul.mubr.bf16.gmra.mxu0 %v595
        %v917 = vpop.f32.mrf.mxu0
        %v918 = vadd.f32 0.0, %v917
        %v919 = vpop.f32.mrf.mxu0
        %v920 = vpop.f32.mrf.mxu0
        %v921 = vadd.f32 0.0, %v920
        %v922 = vpop.f32.mrf.mxu0
        %923 = vmatprep.mubr.bf16.mxu0 %v598
        %924 = vmatmul.mubr.bf16.gmra.mxu0 %v597
        %v925 = vpop.f32.mrf.mxu0
        %v926 = vadd.f32 0.0, %v925
        %v927 = vpop.f32.mrf.mxu0
        %v928 = vpop.f32.mrf.mxu0
        %v929 = vadd.f32 0.0, %v928
        %v930 = vpop.f32.mrf.mxu0
        %931 = vmatprep.mubr.bf16.mxu0 %v600
        %932 = vmatmul.mubr.bf16.gmra.mxu0 %v599
        %v933 = vpop.f32.mrf.mxu0
        %v934 = vadd.f32 0.0, %v933
        %v935 = vpop.f32.mrf.mxu0
        %v936 = vpop.f32.mrf.mxu0
        %v937 = vadd.f32 0.0, %v936
        %v938 = vpop.f32.mrf.mxu0
        %939 = vmatprep.mubr.bf16.mxu0 %v602
        %940 = vmatmul.mubr.bf16.gmra.mxu0 %v601
        %v941 = vpop.f32.mrf.mxu0
        %v942 = vadd.f32 0.0, %v941
        %v943 = vpop.f32.mrf.mxu0
        %v944 = vpop.f32.mrf.mxu0
        %v945 = vadd.f32 0.0, %v944
        %v946 = vpop.f32.mrf.mxu0
        %947 = vmatprep.mubr.bf16.mxu0 %v604
        %948 = vmatmul.mubr.bf16.gmra.mxu0 %v603
        %v949 = vpop.f32.mrf.mxu0
        %v950 = vadd.f32 0.0, %v949
        %v951 = vpop.f32.mrf.mxu0
        %v952 = vpop.f32.mrf.mxu0
        %v953 = vadd.f32 0.0, %v952
        %v954 = vpop.f32.mrf.mxu0
        %955 = vmatprep.mubr.bf16.mxu0 %v606
        %956 = vmatmul.mubr.bf16.gmra.mxu0 %v605
        %v957 = vpop.f32.mrf.mxu0
        %v958 = vadd.f32 0.0, %v957
        %v959 = vpop.f32.mrf.mxu0
        %v960 = vpop.f32.mrf.mxu0
        %v961 = vadd.f32 0.0, %v960
        %v962 = vpop.f32.mrf.mxu0
        %963 = vmatprep.mubr.bf16.mxu0 %v608
        %964 = vmatmul.mubr.bf16.gmra.mxu0 %v607
        %v965 = vpop.f32.mrf.mxu0
        %v966 = vadd.f32 0.0, %v965
        %v967 = vpop.f32.mrf.mxu0
        %v968 = vpop.f32.mrf.mxu0
        %v969 = vadd.f32 0.0, %v968
        %v970 = vpop.f32.mrf.mxu0
        %971 = vmatprep.mubr.bf16.mxu0 %v610
        %972 = vmatmul.mubr.bf16.gmra.mxu0 %v609
        %v973 = vpop.f32.mrf.mxu0
        %v974 = vadd.f32 0.0, %v973
        %v975 = vpop.f32.mrf.mxu0
        %v976 = vpop.f32.mrf.mxu0
        %v977 = vadd.f32 0.0, %v976
        %v978 = vpop.f32.mrf.mxu0
        %979 = vmatprep.mubr.bf16.mxu0 %v612
        %980 = vmatmul.mubr.bf16.gmra.mxu0 %v611
        %v981 = vpop.f32.mrf.mxu0
        %v982 = vadd.f32 0.0, %v981
        %v983 = vpop.f32.mrf.mxu0
        %v984 = vpop.f32.mrf.mxu0
        %v985 = vadd.f32 0.0, %v984
        %v986 = vpop.f32.mrf.mxu0
        %987 = vmatprep.mubr.bf16.mxu0 %v614
        %988 = vmatmul.mubr.bf16.gmra.mxu0 %v613
        %v989 = vpop.f32.mrf.mxu0
        %v990 = vadd.f32 0.0, %v989
        %v991 = vpop.f32.mrf.mxu0
        %v992 = vpop.f32.mrf.mxu0
        %v993 = vadd.f32 0.0, %v992
        %v994 = vpop.f32.mrf.mxu0
        %995 = vmatprep.mubr.bf16.mxu0 %v616
        %996 = vmatmul.mubr.bf16.gmra.mxu0 %v615
        %v997 = vpop.f32.mrf.mxu0
        %v998 = vadd.f32 0.0, %v997
        %v999 = vpop.f32.mrf.mxu0
        %v1000 = vpop.f32.mrf.mxu0
        %v1001 = vadd.f32 0.0, %v1000
        %v1002 = vpop.f32.mrf.mxu0
        %1003 = vmatprep.mubr.bf16.mxu0 %v618
        %1004 = vmatmul.mubr.bf16.gmra.mxu0 %v617
        %v1005 = vpop.f32.mrf.mxu0
        %v1006 = vadd.f32 0.0, %v1005
        %v1007 = vpop.f32.mrf.mxu0
        %v1008 = vpop.f32.mrf.mxu0
        %v1009 = vadd.f32 0.0, %v1008
        %v1010 = vpop.f32.mrf.mxu0
        %1011 = vmatprep.mubr.bf16.mxu0 %v620
        %1012 = vmatmul.mubr.bf16.gmra.mxu0 %v619
        %v1013 = vpop.f32.mrf.mxu0
        %v1014 = vadd.f32 0.0, %v1013
        %v1015 = vpop.f32.mrf.mxu0
        %v1016 = vpop.f32.mrf.mxu0
        %v1017 = vadd.f32 0.0, %v1016
        %v1018 = vpop.f32.mrf.mxu0
        %1019 = vmatprep.mubr.bf16.mxu0 %v622
        %1020 = vmatmul.mubr.bf16.gmra.mxu0 %v621
        %v1021 = vpop.f32.mrf.mxu0
        %v1022 = vadd.f32 0.0, %v1021
        %v1023 = vpop.f32.mrf.mxu0
        %v1024 = vpop.f32.mrf.mxu0
        %v1025 = vadd.f32 0.0, %v1024
        %v1026 = vpop.f32.mrf.mxu0
        %1027 = vmatprep.mubr.bf16.mxu0 %v624
        %1028 = vmatmul.mubr.bf16.gmra.mxu0 %v623
        %v1029 = vpop.f32.mrf.mxu0
        %v1030 = vadd.f32 0.0, %v1029
        %v1031 = vpop.f32.mrf.mxu0
        %v1032 = vpop.f32.mrf.mxu0
        %v1033 = vadd.f32 0.0, %v1032
        %v1034 = vpop.f32.mrf.mxu0
        %1035 = vmatprep.mubr.bf16.mxu0 %v626
        %1036 = vmatmul.mubr.bf16.gmra.mxu0 %v625
        %v1037 = vpop.f32.mrf.mxu0
        %v1038 = vadd.f32 0.0, %v1037
        %v1039 = vpop.f32.mrf.mxu0
        %v1040 = vpop.f32.mrf.mxu0
        %v1041 = vadd.f32 0.0, %v1040
        %v1042 = vpop.f32.mrf.mxu0
        %1043 = vmatprep.mubr.bf16.mxu0 %v628
        %1044 = vmatmul.mubr.bf16.gmra.mxu0 %v627
        %v1045 = vpop.f32.mrf.mxu0
        %v1046 = vadd.f32 0.0, %v1045
        %v1047 = vpop.f32.mrf.mxu0
        %v1048 = vpop.f32.mrf.mxu0
        %v1049 = vadd.f32 0.0, %v1048
        %v1050 = vpop.f32.mrf.mxu0
        %1051 = vmatprep.mubr.bf16.mxu0 %v630
        %1052 = vmatmul.mubr.bf16.gmra.mxu0 %v629
        %v1053 = vpop.f32.mrf.mxu0
        %v1054 = vadd.f32 0.0, %v1053
        %v1055 = vpop.f32.mrf.mxu0
        %v1056 = vpop.f32.mrf.mxu0
        %v1057 = vadd.f32 0.0, %v1056
        %v1058 = vpop.f32.mrf.mxu0
        %1059 = vmatprep.mubr.bf16.mxu0 %v632
        %1060 = vmatmul.mubr.bf16.gmra.mxu0 %v631
        %v1061 = vpop.f32.mrf.mxu0
        %v1062 = vadd.f32 0.0, %v1061
        %v1063 = vpop.f32.mrf.mxu0
        %v1064 = vpop.f32.mrf.mxu0
        %v1065 = vadd.f32 0.0, %v1064
        %v1066 = vpop.f32.mrf.mxu0
        %1067 = vmatprep.mubr.bf16.mxu0 %v634
        %1068 = vmatmul.mubr.bf16.gmra.mxu0 %v633
        %v1069 = vpop.f32.mrf.mxu0
        %v1070 = vadd.f32 0.0, %v1069
        %v1071 = vpop.f32.mrf.mxu0
        %v1072 = vpop.f32.mrf.mxu0
        %v1073 = vadd.f32 0.0, %v1072
        %v1074 = vpop.f32.mrf.mxu0
        %1075 = vmatprep.mubr.bf16.mxu0 %v636
        %1076 = vmatmul.mubr.bf16.gmra.mxu0 %v635
        %v1077 = vpop.f32.mrf.mxu0
        %v1078 = vadd.f32 0.0, %v1077
        %v1079 = vpop.f32.mrf.mxu0
        %v1080 = vpop.f32.mrf.mxu0
        %v1081 = vadd.f32 0.0, %v1080
        %v1082 = vpop.f32.mrf.mxu0
        %1083 = vmatprep.mubr.bf16.mxu0 %v638
        %1084 = vmatmul.mubr.bf16.gmra.mxu0 %v637
        %v1085 = vpop.f32.mrf.mxu0
        %v1086 = vadd.f32 0.0, %v1085
        %v1087 = vpop.f32.mrf.mxu0
        %v1088 = vpop.f32.mrf.mxu0
        %v1089 = vadd.f32 0.0, %v1088
        %v1090 = vpop.f32.mrf.mxu0
        %1091 = vmatprep.mubr.bf16.mxu0 %v640
        %1092 = vmatmul.mubr.bf16.gmra.mxu0 %v639
        %v1093 = vpop.f32.mrf.mxu0
        %v1094 = vadd.f32 0.0, %v1093
        %v1095 = vpop.f32.mrf.mxu0
        %v1096 = vpop.f32.mrf.mxu0
        %v1097 = vadd.f32 0.0, %v1096
        %v1098 = vpop.f32.mrf.mxu0
        %1099 = vmatprep.mubr.bf16.mxu0 %v642
        %1100 = vmatmul.mubr.bf16.gmra.mxu0 %v641
        %v1101 = vpop.f32.mrf.mxu0
        %v1102 = vadd.f32 0.0, %v1101
        %v1103 = vpop.f32.mrf.mxu0
        %v1104 = vpop.f32.mrf.mxu0
        %v1105 = vadd.f32 0.0, %v1104
        %v1106 = vpop.f32.mrf.mxu0
        %1107 = vmatprep.mubr.bf16.mxu0 %v644
        %1108 = vmatmul.mubr.bf16.gmra.mxu0 %v643
        %v1109 = vpop.f32.mrf.mxu0
        %v1110 = vadd.f32 0.0, %v1109
        %v1111 = vpop.f32.mrf.mxu0
        %v1112 = vpop.f32.mrf.mxu0
        %v1113 = vadd.f32 0.0, %v1112
        %v1114 = vpop.f32.mrf.mxu0
        %1115 = vmatprep.mubr.bf16.mxu0 %v646
        %1116 = vmatmul.mubr.bf16.gmra.mxu0 %v645
        %v1117 = vpop.f32.mrf.mxu0
        %v1118 = vadd.f32 0.0, %v1117
        %v1119 = vpop.f32.mrf.mxu0
        %v1120 = vpop.f32.mrf.mxu0
        %v1121 = vadd.f32 0.0, %v1120
        %v1122 = vpop.f32.mrf.mxu0
        %1123 = vmatprep.mubr.bf16.mxu0 %v648
        %1124 = vmatmul.mubr.bf16.gmra.mxu0 %v647
        %v1125 = vpop.f32.mrf.mxu0
        %v1126 = vadd.f32 0.0, %v1125
        %v1127 = vpop.f32.mrf.mxu0
        %v1128 = vpop.f32.mrf.mxu0
        %v1129 = vadd.f32 0.0, %v1128
        %v1130 = vpop.f32.mrf.mxu0
        %1131 = vmatprep.mubr.bf16.mxu0 %v650
        %1132 = vmatmul.mubr.bf16.gmra.mxu0 %v649
        %v1133 = vpop.f32.mrf.mxu0
        %v1134 = vadd.f32 0.0, %v1133
        %v1135 = vpop.f32.mrf.mxu0
        %v1136 = vpop.f32.mrf.mxu0
        %v1137 = vadd.f32 0.0, %v1136
        %v1138 = vpop.f32.mrf.mxu0
        %1139 = vdwg.mxu0
        %v1140 = vld [vmem:[#allocation7] sm:$0x1]
        %v1141 = vld [vmem:[#allocation7 + $0x1] sm:$0x1]
        %v1142 = vld [vmem:[#allocation7 + $0x2] sm:$0x1]
        %v1143 = vld [vmem:[#allocation8] sm:$0xf]
        %v1144 = vld [vmem:[#allocation8 + $0x4] sm:$0xf]
        %v1145 = vld [vmem:[#allocation8 + $0x8] sm:$0xf]
        %v1146 = vld [vmem:[#allocation8 + $0xc] sm:$0xf]
        %v1147 = vld [vmem:[#allocation8 + $0x10] sm:$0xf]
        %v1148 = vld [vmem:[#allocation8 + $0x14] sm:$0xf]
        %v1149 = vld [vmem:[#allocation8 + $0x18] sm:$0xf]
        %v1150 = vld [vmem:[#allocation8 + $0x1c] sm:$0xf]
        %v1151 = vld [vmem:[#allocation8 + $0x20] sm:$0xf]
        %v1152 = vld [vmem:[#allocation8 + $0x24] sm:$0xf]
        %v1153 = vld [vmem:[#allocation8 + $0x28] sm:$0xf]
        %v1154 = vld [vmem:[#allocation8 + $0x2c] sm:$0xf]
        %v1155 = vld [vmem:[#allocation8 + $0x30] sm:$0xf]
        %v1156 = vld [vmem:[#allocation8 + $0x34] sm:$0xf]
        %v1157 = vld [vmem:[#allocation8 + $0x38] sm:$0xf]
        %v1158 = vld [vmem:[#allocation8 + $0x3c] sm:$0xf]
        %v1159 = vunpack.c.l.bf16 %v1143
        %v1160 = vunpack.c.l.bf16 %v1144
        %v1161 = vunpack.c.l.bf16 %v1145
        %v1162 = vunpack.c.l.bf16 %v1146
        %v1163 = vunpack.c.l.bf16 %v1147
        %v1164 = vunpack.c.l.bf16 %v1148
        %v1165 = vunpack.c.l.bf16 %v1149
        %v1166 = vunpack.c.l.bf16 %v1150
        %v1167 = vunpack.c.l.bf16 %v1151
        %v1168 = vunpack.c.l.bf16 %v1152
        %v1169 = vunpack.c.l.bf16 %v1153
        %v1170 = vunpack.c.l.bf16 %v1154
        %v1171 = vunpack.c.l.bf16 %v1155
        %v1172 = vunpack.c.l.bf16 %v1156
        %v1173 = vunpack.c.l.bf16 %v1157
        %v1174 = vunpack.c.l.bf16 %v1158
        %v1175 = vadd.f32 %v854, %v857
        %v1176 = vadd.f32 %v1175, %v862
        %v1177 = vadd.f32 %v1176, %v865
        %v1178 = vadd.f32 %v1177, %v870
        %v1179 = vadd.f32 %v1178, %v873
        %v1180 = vadd.f32 %v1179, %v878
        %v1181 = vadd.f32 %v1180, %v881
        %v1182 = vadd.f32 %v1181, %v886
        %v1183 = vadd.f32 %v1182, %v889
        %v1184 = vadd.f32 %v1183, %v894
        %v1185 = vadd.f32 %v1184, %v897
        %v1186 = vadd.f32 %v1185, %v902
        %v1187 = vadd.f32 %v1186, %v905
        %v1188 = vadd.f32 %v1187, %v910
        %v1189 = vadd.f32 %v1188, %v913
        %v1190 = vadd.f32 %v1189, %v918
        %v1191 = vadd.f32 %v1190, %v921
        %v1192 = vadd.f32 %v1191, %v926
        %v1193 = vadd.f32 %v1192, %v929
        %v1194 = vadd.f32 %v1193, %v934
        %v1195 = vadd.f32 %v1194, %v937
        %v1196 = vadd.f32 %v1195, %v942
        %v1197 = vadd.f32 %v1196, %v945
        %v1198 = vadd.f32 %v1197, %v950
        %v1199 = vadd.f32 %v1198, %v953
        %v1200 = vadd.f32 %v1199, %v958
        %v1201 = vadd.f32 %v1200, %v961
        %v1202 = vadd.f32 %v1201, %v966
        %v1203 = vadd.f32 %v1202, %v969
        %v1204 = vadd.f32 %v1203, %v974
        %v1205 = vadd.f32 %v1204, %v977
        %v1206 = vadd.f32 %v1205, %v982
        %v1207 = vadd.f32 %v1206, %v985
        %v1208 = vadd.f32 %v1207, %v990
        %v1209 = vadd.f32 %v1208, %v993
        %v1210 = vadd.f32 %v1209, %v998
        %v1211 = vadd.f32 %v1210, %v1001
        %v1212 = vadd.f32 %v1211, %v1006
        %v1213 = vadd.f32 %v1212, %v1009
        %v1214 = vadd.f32 %v1213, %v1014
        %v1215 = vadd.f32 %v1214, %v1017
        %v1216 = vadd.f32 %v1215, %v1022
        %v1217 = vadd.f32 %v1216, %v1025
        %v1218 = vadd.f32 %v1217, %v1030
        %v1219 = vadd.f32 %v1218, %v1033
        %v1220 = vadd.f32 %v1219, %v1038
        %v1221 = vadd.f32 %v1220, %v1041
        %v1222 = vadd.f32 %v1221, %v1046
        %v1223 = vadd.f32 %v1222, %v1049
        %v1224 = vadd.f32 %v1223, %v1054
        %v1225 = vadd.f32 %v1224, %v1057
        %v1226 = vadd.f32 %v1225, %v1062
        %v1227 = vadd.f32 %v1226, %v1065
        %v1228 = vadd.f32 %v1227, %v1070
        %v1229 = vadd.f32 %v1228, %v1073
        %v1230 = vadd.f32 %v1229, %v1078
        %v1231 = vadd.f32 %v1230, %v1081
        %v1232 = vadd.f32 %v1231, %v1086
        %v1233 = vadd.f32 %v1232, %v1089
        %v1234 = vadd.f32 %v1233, %v1094
        %v1235 = vadd.f32 %v1234, %v1097
        %v1236 = vadd.f32 %v1235, %v1102
        %v1237 = vadd.f32 %v1236, %v1105
        %v1238 = vadd.f32 %v1237, %v1110
        %v1239 = vadd.f32 %v1238, %v1113
        %v1240 = vadd.f32 %v1239, %v1118
        %v1241 = vadd.f32 %v1240, %v1121
        %v1242 = vadd.f32 %v1241, %v1126
        %v1243 = vadd.f32 %v1242, %v1129
        %v1244 = vadd.f32 %v1243, %v1134
        %v1245 = vadd.f32 %v1244, %v1137
        %v1246 = vrot.slane %v1245, 4
        %v1247 = vadd.f32 %v1245, %v1246
        %v1248 = vrot.slane %v1247, 2
        %v1249 = vadd.f32 %v1247, %v1248
        %v1250 = vrot.slane %v1249, 1
        %v1251 = vadd.f32 %v1249, %v1250
        %v1252 = vmul.f32 %v854, %v854
        %v1253 = vmul.f32 %v857, %v857
        %v1254 = vmul.f32 %v862, %v862
        %v1255 = vmul.f32 %v865, %v865
        %v1256 = vmul.f32 %v870, %v870
        %v1257 = vmul.f32 %v873, %v873
        %v1258 = vmul.f32 %v878, %v878
        %v1259 = vmul.f32 %v881, %v881
        %v1260 = vmul.f32 %v886, %v886
        %v1261 = vmul.f32 %v889, %v889
        %v1262 = vmul.f32 %v894, %v894
        %v1263 = vmul.f32 %v897, %v897
        %v1264 = vmul.f32 %v902, %v902
        %v1265 = vmul.f32 %v905, %v905
        %v1266 = vmul.f32 %v910, %v910
        %v1267 = vmul.f32 %v913, %v913
        %v1268 = vmul.f32 %v918, %v918
        %v1269 = vmul.f32 %v921, %v921
        %v1270 = vmul.f32 %v926, %v926
        %v1271 = vmul.f32 %v929, %v929
        %v1272 = vmul.f32 %v934, %v934
        %v1273 = vmul.f32 %v937, %v937
        %v1274 = vmul.f32 %v942, %v942
        %v1275 = vmul.f32 %v945, %v945
        %v1276 = vmul.f32 %v950, %v950
        %v1277 = vmul.f32 %v953, %v953
        %v1278 = vmul.f32 %v958, %v958
        %v1279 = vmul.f32 %v961, %v961
        %v1280 = vmul.f32 %v966, %v966
        %v1281 = vmul.f32 %v969, %v969
        %v1282 = vmul.f32 %v974, %v974
        %v1283 = vmul.f32 %v977, %v977
        %v1284 = vmul.f32 %v982, %v982
        %v1285 = vmul.f32 %v985, %v985
        %v1286 = vmul.f32 %v990, %v990
        %v1287 = vmul.f32 %v993, %v993
        %v1288 = vmul.f32 %v998, %v998
        %v1289 = vmul.f32 %v1001, %v1001
        %v1290 = vmul.f32 %v1006, %v1006
        %v1291 = vmul.f32 %v1009, %v1009
        %v1292 = vmul.f32 %v1014, %v1014
        %v1293 = vmul.f32 %v1017, %v1017
        %v1294 = vmul.f32 %v1022, %v1022
        %v1295 = vmul.f32 %v1025, %v1025
        %v1296 = vmul.f32 %v1030, %v1030
        %v1297 = vmul.f32 %v1033, %v1033
        %v1298 = vmul.f32 %v1038, %v1038
        %v1299 = vmul.f32 %v1041, %v1041
        %v1300 = vmul.f32 %v1046, %v1046
        %v1301 = vmul.f32 %v1049, %v1049
        %v1302 = vmul.f32 %v1054, %v1054
        %v1303 = vmul.f32 %v1057, %v1057
        %v1304 = vmul.f32 %v1062, %v1062
        %v1305 = vmul.f32 %v1065, %v1065
        %v1306 = vmul.f32 %v1070, %v1070
        %v1307 = vmul.f32 %v1073, %v1073
        %v1308 = vmul.f32 %v1078, %v1078
        %v1309 = vmul.f32 %v1081, %v1081
        %v1310 = vmul.f32 %v1086, %v1086
        %v1311 = vmul.f32 %v1089, %v1089
        %v1312 = vmul.f32 %v1094, %v1094
        %v1313 = vmul.f32 %v1097, %v1097
        %v1314 = vmul.f32 %v1102, %v1102
        %v1315 = vmul.f32 %v1105, %v1105
        %v1316 = vmul.f32 %v1110, %v1110
        %v1317 = vmul.f32 %v1113, %v1113
        %v1318 = vmul.f32 %v1118, %v1118
        %v1319 = vmul.f32 %v1121, %v1121
        %v1320 = vmul.f32 %v1126, %v1126
        %v1321 = vmul.f32 %v1129, %v1129
        %v1322 = vmul.f32 %v1134, %v1134
        %v1323 = vmul.f32 %v1137, %v1137
        %v1324 = vadd.f32 %v1252, %v1253
        %v1325 = vadd.f32 %v1324, %v1254
        %v1326 = vadd.f32 %v1325, %v1255
        %v1327 = vadd.f32 %v1326, %v1256
        %v1328 = vadd.f32 %v1327, %v1257
        %v1329 = vadd.f32 %v1328, %v1258
        %v1330 = vadd.f32 %v1329, %v1259
        %v1331 = vadd.f32 %v1330, %v1260
        %v1332 = vadd.f32 %v1331, %v1261
        %v1333 = vadd.f32 %v1332, %v1262
        %v1334 = vadd.f32 %v1333, %v1263
        %v1335 = vadd.f32 %v1334, %v1264
        %v1336 = vadd.f32 %v1335, %v1265
        %v1337 = vadd.f32 %v1336, %v1266
        %v1338 = vadd.f32 %v1337, %v1267
        %v1339 = vadd.f32 %v1338, %v1268
        %v1340 = vadd.f32 %v1339, %v1269
        %v1341 = vadd.f32 %v1340, %v1270
        %v1342 = vadd.f32 %v1341, %v1271
        %v1343 = vadd.f32 %v1342, %v1272
        %v1344 = vadd.f32 %v1343, %v1273
        %v1345 = vadd.f32 %v1344, %v1274
        %v1346 = vadd.f32 %v1345, %v1275
        %v1347 = vadd.f32 %v1346, %v1276
        %v1348 = vadd.f32 %v1347, %v1277
        %v1349 = vadd.f32 %v1348, %v1278
        %v1350 = vadd.f32 %v1349, %v1279
        %v1351 = vadd.f32 %v1350, %v1280
        %v1352 = vadd.f32 %v1351, %v1281
        %v1353 = vadd.f32 %v1352, %v1282
        %v1354 = vadd.f32 %v1353, %v1283
        %v1355 = vadd.f32 %v1354, %v1284
        %v1356 = vadd.f32 %v1355, %v1285
        %v1357 = vadd.f32 %v1356, %v1286
        %v1358 = vadd.f32 %v1357, %v1287
        %v1359 = vadd.f32 %v1358, %v1288
        %v1360 = vadd.f32 %v1359, %v1289
        %v1361 = vadd.f32 %v1360, %v1290
        %v1362 = vadd.f32 %v1361, %v1291
        %v1363 = vadd.f32 %v1362, %v1292
        %v1364 = vadd.f32 %v1363, %v1293
        %v1365 = vadd.f32 %v1364, %v1294
        %v1366 = vadd.f32 %v1365, %v1295
        %v1367 = vadd.f32 %v1366, %v1296
        %v1368 = vadd.f32 %v1367, %v1297
        %v1369 = vadd.f32 %v1368, %v1298
        %v1370 = vadd.f32 %v1369, %v1299
        %v1371 = vadd.f32 %v1370, %v1300
        %v1372 = vadd.f32 %v1371, %v1301
        %v1373 = vadd.f32 %v1372, %v1302
        %v1374 = vadd.f32 %v1373, %v1303
        %v1375 = vadd.f32 %v1374, %v1304
        %v1376 = vadd.f32 %v1375, %v1305
        %v1377 = vadd.f32 %v1376, %v1306
        %v1378 = vadd.f32 %v1377, %v1307
        %v1379 = vadd.f32 %v1378, %v1308
        %v1380 = vadd.f32 %v1379, %v1309
        %v1381 = vadd.f32 %v1380, %v1310
        %v1382 = vadd.f32 %v1381, %v1311
        %v1383 = vadd.f32 %v1382, %v1312
        %v1384 = vadd.f32 %v1383, %v1313
        %v1385 = vadd.f32 %v1384, %v1314
        %v1386 = vadd.f32 %v1385, %v1315
        %v1387 = vadd.f32 %v1386, %v1316
        %v1388 = vadd.f32 %v1387, %v1317
        %v1389 = vadd.f32 %v1388, %v1318
        %v1390 = vadd.f32 %v1389, %v1319
        %v1391 = vadd.f32 %v1390, %v1320
        %v1392 = vadd.f32 %v1391, %v1321
        %v1393 = vadd.f32 %v1392, %v1322
        %v1394 = vadd.f32 %v1393, %v1323
        %v1395 = vrot.slane %v1394, 4
        %v1396 = vadd.f32 %v1394, %v1395
        %v1397 = vrot.slane %v1396, 2
        %v1398 = vadd.f32 %v1396, %v1397
        %v1399 = vrot.slane %v1398, 1
        %v1400 = vadd.f32 %v1398, %v1399
        %v1401 = vmul.f32 %v1140, 576.0
        %v1402 = vadd.f32 %v1251, %v1401
        %v1403 = vmul.f32 %v1140, 2.0
        %v1404 = vmul.f32 %v1403, %v1251
        %v1405 = vadd.f32 %v1400, %v1404
        %v1406 = vmul.f32 %v1140, %v1140
        %v1407 = vmul.f32 %v1406, 576.0
        %v1408 = vadd.f32 %v1405, %v1407
        %v1410 = vrot.slane %v1408, 7
        %vm1412 = vcmask 1040384
        %v1413 = vsel %vm1412, %v1402, %v1410
        %1414 = vmatprep.subr.mxu0 0.0
        %1415 = vmatpush1.msra.mxu0 %v1174
        %1416 = vmatprep.subr.mxu0 0.0
        %1417 = vmatpush1.msra.mxu0 %v1173
        %1418 = vmatprep.subr.mxu0 0.0
        %1419 = vmatpush1.msra.mxu0 %v1172
        %1420 = vmatprep.subr.mxu0 0.0
        %1421 = vmatpush1.msra.mxu0 %v1171
        %1422 = vmatprep.subr.mxu0 0.0
        %1423 = vmatpush1.msra.mxu0 %v1170
        %1424 = vmatprep.subr.mxu0 0.0
        %1425 = vmatpush1.msra.mxu0 %v1169
        %1426 = vmatprep.subr.mxu0 0.0
        %1427 = vmatpush1.msra.mxu0 %v1168
        %1428 = vmatprep.subr.mxu0 0.0
        %1429 = vmatpush1.msra.mxu0 %v1167
        %1430 = vmatprep.subr.mxu0 0.0
        %1431 = vmatpush1.msra.mxu0 %v1166
        %1432 = vmatprep.subr.mxu0 0.0
        %1433 = vmatpush1.msra.mxu0 %v1165
        %1434 = vmatprep.subr.mxu0 0.0
        %1435 = vmatpush1.msra.mxu0 %v1164
        %1436 = vmatprep.subr.mxu0 0.0
        %1437 = vmatpush1.msra.mxu0 %v1163
        %1438 = vmatprep.subr.mxu0 0.0
        %1439 = vmatpush1.msra.mxu0 %v1162
        %1440 = vmatprep.subr.mxu0 0.0
        %1441 = vmatpush1.msra.mxu0 %v1161
        %1442 = vmatprep.subr.mxu0 0.0
        %1443 = vmatpush1.msra.mxu0 %v1160
        %1444 = vmatprep.subr.mxu0 0.0
        %1445 = vmatpush1.msra.mxu0 %v1159
        %1446 = vmatprep.subr.mxu0 0.0
        %1447 = vmatpush2.msra.mxu0 0.0
        %1448 = vmatprep.subr.mxu0 0.0
        %1449 = vmatpush2.msra.mxu0 0.0
        %1450 = vmatprep.subr.mxu0 0.0
        %1451 = vmatpush2.msra.mxu0 0.0
        %1452 = vmatprep.subr.mxu0 0.0
        %1453 = vmatpush2.msra.mxu0 0.0
        %1454 = vmatprep.subr.mxu0 0.0
        %1455 = vmatpush2.msra.mxu0 0.0
        %1456 = vmatprep.subr.mxu0 0.0
        %1457 = vmatpush2.msra.mxu0 0.0
        %1458 = vmatprep.subr.mxu0 0.0
        %1459 = vmatpush2.msra.mxu0 0.0
        %1460 = vmatprep.subr.mxu0 0.0
        %1461 = vmatpush2.msra.mxu0 0.0
        %1462 = vmatprep.subr.mxu0 0.0
        %1463 = vmatpush2.msra.mxu0 0.0
        %1464 = vmatprep.subr.mxu0 0.0
        %1465 = vmatpush2.msra.mxu0 0.0
        %1466 = vmatprep.subr.mxu0 0.0
        %1467 = vmatpush2.msra.mxu0 0.0
        %1468 = vmatprep.subr.mxu0 0.0
        %1469 = vmatpush2.msra.mxu0 0.0
        %1470 = vmatprep.subr.mxu0 0.0
        %1471 = vmatpush2.msra.mxu0 0.0
        %1472 = vmatprep.subr.mxu0 0.0
        %1473 = vmatpush2.msra.mxu0 0.0
        %1474 = vmatprep.subr.mxu0 0.0
        %1475 = vmatpush2.msra.mxu0 0.0
        %1476 = vmatprep.subr.mxu0 0.0
        %1477 = vmatpush2.msra.mxu0 0.0
        %1478 = vmatprep.mubr.f32.mxu0 0.0
        %1479 = vmatmul.mubr.f32.gmra.mxu0 %v1413
        %v1480 = vpop.f32.mrf.mxu0
        %v1481 = vadd.f32 0.0, %v1480
        %v1482 = vpop.f32.mrf.mxu0
        %1483 = vdwg.mxu0
        %v1484 = vmul.f32 %v1481, 0.00086805556
        %v1485 = vmul.f32 %v1484, %v1484
        %v1487 = vrot.slane %v1485, 7
        %v1489 = vsub.f32 %v1484, %v1487
        %v1490 = vadd.f32 %v1489, 1e-05
        %v1491 = vrsqrt.pop %v1490
        %v1493 = vrot.slane %v1491, 1
        %v1495 = vmul.f32 %v1141, %v1493
        %v1496 = vsub.f32 %v1140, %v1484
        %v1497 = vmul.f32 %v1496, %v1495
        %v1498 = vadd.f32 %v1142, %v1497
        %v1499 = vlaneseq
        %v1500 = vshrl.u32 %v1499, 7
        %v1501 = vsub.s32 0, %v1500
        %v1502 = vrot.slane %v1495, %v1501
        %v1503 = vmul.f32 %v854, %v1502
        %v1504 = vmul.f32 %v857, %v1502
        %v1505 = vmul.f32 %v862, %v1502
        %v1506 = vmul.f32 %v865, %v1502
        %v1507 = vmul.f32 %v870, %v1502
        %v1508 = vmul.f32 %v873, %v1502
        %v1509 = vmul.f32 %v878, %v1502
        %v1510 = vmul.f32 %v881, %v1502
        %v1511 = vmul.f32 %v886, %v1502
        %v1512 = vmul.f32 %v889, %v1502
        %v1513 = vmul.f32 %v894, %v1502
        %v1514 = vmul.f32 %v897, %v1502
        %v1515 = vmul.f32 %v902, %v1502
        %v1516 = vmul.f32 %v905, %v1502
        %v1517 = vmul.f32 %v910, %v1502
        %v1518 = vmul.f32 %v913, %v1502
        %v1519 = vmul.f32 %v918, %v1502
        %v1520 = vmul.f32 %v921, %v1502
        %v1521 = vmul.f32 %v926, %v1502
        %v1522 = vmul.f32 %v929, %v1502
        %v1523 = vmul.f32 %v934, %v1502
        %v1524 = vmul.f32 %v937, %v1502
        %v1525 = vmul.f32 %v942, %v1502
        %v1526 = vmul.f32 %v945, %v1502
        %v1527 = vmul.f32 %v950, %v1502
        %v1528 = vmul.f32 %v953, %v1502
        %v1529 = vmul.f32 %v958, %v1502
        %v1530 = vmul.f32 %v961, %v1502
        %v1531 = vmul.f32 %v966, %v1502
        %v1532 = vmul.f32 %v969, %v1502
        %v1533 = vmul.f32 %v974, %v1502
        %v1534 = vmul.f32 %v977, %v1502
        %v1535 = vmul.f32 %v982, %v1502
        %v1536 = vmul.f32 %v985, %v1502
        %v1537 = vmul.f32 %v990, %v1502
        %v1538 = vmul.f32 %v993, %v1502
        %v1539 = vmul.f32 %v998, %v1502
        %v1540 = vmul.f32 %v1001, %v1502
        %v1541 = vmul.f32 %v1006, %v1502
        %v1542 = vmul.f32 %v1009, %v1502
        %v1543 = vmul.f32 %v1014, %v1502
        %v1544 = vmul.f32 %v1017, %v1502
        %v1545 = vmul.f32 %v1022, %v1502
        %v1546 = vmul.f32 %v1025, %v1502
        %v1547 = vmul.f32 %v1030, %v1502
        %v1548 = vmul.f32 %v1033, %v1502
        %v1549 = vmul.f32 %v1038, %v1502
        %v1550 = vmul.f32 %v1041, %v1502
        %v1551 = vmul.f32 %v1046, %v1502
        %v1552 = vmul.f32 %v1049, %v1502
        %v1553 = vmul.f32 %v1054, %v1502
        %v1554 = vmul.f32 %v1057, %v1502
        %v1555 = vmul.f32 %v1062, %v1502
        %v1556 = vmul.f32 %v1065, %v1502
        %v1557 = vmul.f32 %v1070, %v1502
        %v1558 = vmul.f32 %v1073, %v1502
        %v1559 = vmul.f32 %v1078, %v1502
        %v1560 = vmul.f32 %v1081, %v1502
        %v1561 = vmul.f32 %v1086, %v1502
        %v1562 = vmul.f32 %v1089, %v1502
        %v1563 = vmul.f32 %v1094, %v1502
        %v1564 = vmul.f32 %v1097, %v1502
        %v1565 = vmul.f32 %v1102, %v1502
        %v1566 = vmul.f32 %v1105, %v1502
        %v1567 = vmul.f32 %v1110, %v1502
        %v1568 = vmul.f32 %v1113, %v1502
        %v1569 = vmul.f32 %v1118, %v1502
        %v1570 = vmul.f32 %v1121, %v1502
        %v1571 = vmul.f32 %v1126, %v1502
        %v1572 = vmul.f32 %v1129, %v1502
        %v1573 = vmul.f32 %v1134, %v1502
        %v1574 = vmul.f32 %v1137, %v1502
        %v1575 = vlaneseq
        %v1576 = vshrl.u32 %v1575, 7
        %v1577 = vsub.s32 0, %v1576
        %v1578 = vrot.slane %v1498, %v1577
        %v1579 = vadd.f32 %v1503, %v1578
        %v1580 = vadd.f32 %v1504, %v1578
        %v1581 = vadd.f32 %v1505, %v1578
        %v1582 = vadd.f32 %v1506, %v1578
        %v1583 = vadd.f32 %v1507, %v1578
        %v1584 = vadd.f32 %v1508, %v1578
        %v1585 = vadd.f32 %v1509, %v1578
        %v1586 = vadd.f32 %v1510, %v1578
        %v1587 = vadd.f32 %v1511, %v1578
        %v1588 = vadd.f32 %v1512, %v1578
        %v1589 = vadd.f32 %v1513, %v1578
        %v1590 = vadd.f32 %v1514, %v1578
        %v1591 = vadd.f32 %v1515, %v1578
        %v1592 = vadd.f32 %v1516, %v1578
        %v1593 = vadd.f32 %v1517, %v1578
        %v1594 = vadd.f32 %v1518, %v1578
        %v1595 = vadd.f32 %v1519, %v1578
        %v1596 = vadd.f32 %v1520, %v1578
        %v1597 = vadd.f32 %v1521, %v1578
        %v1598 = vadd.f32 %v1522, %v1578
        %v1599 = vadd.f32 %v1523, %v1578
        %v1600 = vadd.f32 %v1524, %v1578
        %v1601 = vadd.f32 %v1525, %v1578
        %v1602 = vadd.f32 %v1526, %v1578
        %v1603 = vadd.f32 %v1527, %v1578
        %v1604 = vadd.f32 %v1528, %v1578
        %v1605 = vadd.f32 %v1529, %v1578
        %v1606 = vadd.f32 %v1530, %v1578
        %v1607 = vadd.f32 %v1531, %v1578
        %v1608 = vadd.f32 %v1532, %v1578
        %v1609 = vadd.f32 %v1533, %v1578
        %v1610 = vadd.f32 %v1534, %v1578
        %v1611 = vadd.f32 %v1535, %v1578
        %v1612 = vadd.f32 %v1536, %v1578
        %v1613 = vadd.f32 %v1537, %v1578
        %v1614 = vadd.f32 %v1538, %v1578
        %v1615 = vadd.f32 %v1539, %v1578
        %v1616 = vadd.f32 %v1540, %v1578
        %v1617 = vadd.f32 %v1541, %v1578
        %v1618 = vadd.f32 %v1542, %v1578
        %v1619 = vadd.f32 %v1543, %v1578
        %v1620 = vadd.f32 %v1544, %v1578
        %v1621 = vadd.f32 %v1545, %v1578
        %v1622 = vadd.f32 %v1546, %v1578
        %v1623 = vadd.f32 %v1547, %v1578
        %v1624 = vadd.f32 %v1548, %v1578
        %v1625 = vadd.f32 %v1549, %v1578
        %v1626 = vadd.f32 %v1550, %v1578
        %v1627 = vadd.f32 %v1551, %v1578
        %v1628 = vadd.f32 %v1552, %v1578
        %v1629 = vadd.f32 %v1553, %v1578
        %v1630 = vadd.f32 %v1554, %v1578
        %v1631 = vadd.f32 %v1555, %v1578
        %v1632 = vadd.f32 %v1556, %v1578
        %v1633 = vadd.f32 %v1557, %v1578
        %v1634 = vadd.f32 %v1558, %v1578
        %v1635 = vadd.f32 %v1559, %v1578
        %v1636 = vadd.f32 %v1560, %v1578
        %v1637 = vadd.f32 %v1561, %v1578
        %v1638 = vadd.f32 %v1562, %v1578
        %v1639 = vadd.f32 %v1563, %v1578
        %v1640 = vadd.f32 %v1564, %v1578
        %v1641 = vadd.f32 %v1565, %v1578
        %v1642 = vadd.f32 %v1566, %v1578
        %v1643 = vadd.f32 %v1567, %v1578
        %v1644 = vadd.f32 %v1568, %v1578
        %v1645 = vadd.f32 %v1569, %v1578
        %v1646 = vadd.f32 %v1570, %v1578
        %v1647 = vadd.f32 %v1571, %v1578
        %v1648 = vadd.f32 %v1572, %v1578
        %v1649 = vadd.f32 %v1573, %v1578
        %v1650 = vadd.f32 %v1574, %v1578
        %v1651 = vmax.f32 %v1579, 0.0
        %v1652 = vmax.f32 %v1580, 0.0
        %v1653 = vmax.f32 %v1581, 0.0
        %v1654 = vmax.f32 %v1582, 0.0
        %v1655 = vmax.f32 %v1583, 0.0
        %v1656 = vmax.f32 %v1584, 0.0
        %v1657 = vmax.f32 %v1585, 0.0
        %v1658 = vmax.f32 %v1586, 0.0
        %v1659 = vmax.f32 %v1587, 0.0
        %v1660 = vmax.f32 %v1588, 0.0
        %v1661 = vmax.f32 %v1589, 0.0
        %v1662 = vmax.f32 %v1590, 0.0
        %v1663 = vmax.f32 %v1591, 0.0
        %v1664 = vmax.f32 %v1592, 0.0
        %v1665 = vmax.f32 %v1593, 0.0
        %v1666 = vmax.f32 %v1594, 0.0
        %v1667 = vmax.f32 %v1595, 0.0
        %v1668 = vmax.f32 %v1596, 0.0
        %v1669 = vmax.f32 %v1597, 0.0
        %v1670 = vmax.f32 %v1598, 0.0
        %v1671 = vmax.f32 %v1599, 0.0
        %v1672 = vmax.f32 %v1600, 0.0
        %v1673 = vmax.f32 %v1601, 0.0
        %v1674 = vmax.f32 %v1602, 0.0
        %v1675 = vmax.f32 %v1603, 0.0
        %v1676 = vmax.f32 %v1604, 0.0
        %v1677 = vmax.f32 %v1605, 0.0
        %v1678 = vmax.f32 %v1606, 0.0
        %v1679 = vmax.f32 %v1607, 0.0
        %v1680 = vmax.f32 %v1608, 0.0
        %v1681 = vmax.f32 %v1609, 0.0
        %v1682 = vmax.f32 %v1610, 0.0
        %v1683 = vmax.f32 %v1611, 0.0
        %v1684 = vmax.f32 %v1612, 0.0
        %v1685 = vmax.f32 %v1613, 0.0
        %v1686 = vmax.f32 %v1614, 0.0
        %v1687 = vmax.f32 %v1615, 0.0
        %v1688 = vmax.f32 %v1616, 0.0
        %v1689 = vmax.f32 %v1617, 0.0
        %v1690 = vmax.f32 %v1618, 0.0
        %v1691 = vmax.f32 %v1619, 0.0
        %v1692 = vmax.f32 %v1620, 0.0
        %v1693 = vmax.f32 %v1621, 0.0
        %v1694 = vmax.f32 %v1622, 0.0
        %v1695 = vmax.f32 %v1623, 0.0
        %v1696 = vmax.f32 %v1624, 0.0
        %v1697 = vmax.f32 %v1625, 0.0
        %v1698 = vmax.f32 %v1626, 0.0
        %v1699 = vmax.f32 %v1627, 0.0
        %v1700 = vmax.f32 %v1628, 0.0
        %v1701 = vmax.f32 %v1629, 0.0
        %v1702 = vmax.f32 %v1630, 0.0
        %v1703 = vmax.f32 %v1631, 0.0
        %v1704 = vmax.f32 %v1632, 0.0
        %v1705 = vmax.f32 %v1633, 0.0
        %v1706 = vmax.f32 %v1634, 0.0
        %v1707 = vmax.f32 %v1635, 0.0
        %v1708 = vmax.f32 %v1636, 0.0
        %v1709 = vmax.f32 %v1637, 0.0
        %v1710 = vmax.f32 %v1638, 0.0
        %v1711 = vmax.f32 %v1639, 0.0
        %v1712 = vmax.f32 %v1640, 0.0
        %v1713 = vmax.f32 %v1641, 0.0
        %v1714 = vmax.f32 %v1642, 0.0
        %v1715 = vmax.f32 %v1643, 0.0
        %v1716 = vmax.f32 %v1644, 0.0
        %v1717 = vmax.f32 %v1645, 0.0
        %v1718 = vmax.f32 %v1646, 0.0
        %v1719 = vmax.f32 %v1647, 0.0
        %v1720 = vmax.f32 %v1648, 0.0
        %v1721 = vmax.f32 %v1649, 0.0
        %v1722 = vmax.f32 %v1650, 0.0
        %v1723 = vpack.c.bf16 %v1652, %v1651
        %v1724 = vpack.c.bf16 %v1654, %v1653
        %v1725 = vpack.c.bf16 %v1656, %v1655
        %v1726 = vpack.c.bf16 %v1658, %v1657
        %v1727 = vpack.c.bf16 %v1660, %v1659
        %v1728 = vpack.c.bf16 %v1662, %v1661
        %v1729 = vpack.c.bf16 %v1664, %v1663
        %v1730 = vpack.c.bf16 %v1666, %v1665
        %v1731 = vpack.c.bf16 %v1668, %v1667
        %v1732 = vpack.c.bf16 %v1670, %v1669
        %v1733 = vpack.c.bf16 %v1672, %v1671
        %v1734 = vpack.c.bf16 %v1674, %v1673
        %v1735 = vpack.c.bf16 %v1676, %v1675
        %v1736 = vpack.c.bf16 %v1678, %v1677
        %v1737 = vpack.c.bf16 %v1680, %v1679
        %v1738 = vpack.c.bf16 %v1682, %v1681
        %v1739 = vpack.c.bf16 %v1684, %v1683
        %v1740 = vpack.c.bf16 %v1686, %v1685
        %v1741 = vpack.c.bf16 %v1688, %v1687
        %v1742 = vpack.c.bf16 %v1690, %v1689
        %v1743 = vpack.c.bf16 %v1692, %v1691
        %v1744 = vpack.c.bf16 %v1694, %v1693
        %v1745 = vpack.c.bf16 %v1696, %v1695
        %v1746 = vpack.c.bf16 %v1698, %v1697
        %v1747 = vpack.c.bf16 %v1700, %v1699
        %v1748 = vpack.c.bf16 %v1702, %v1701
        %v1749 = vpack.c.bf16 %v1704, %v1703
        %v1750 = vpack.c.bf16 %v1706, %v1705
        %v1751 = vpack.c.bf16 %v1708, %v1707
        %v1752 = vpack.c.bf16 %v1710, %v1709
        %v1753 = vpack.c.bf16 %v1712, %v1711
        %v1754 = vpack.c.bf16 %v1714, %v1713
        %v1755 = vpack.c.bf16 %v1716, %v1715
        %v1756 = vpack.c.bf16 %v1718, %v1717
        %v1757 = vpack.c.bf16 %v1720, %v1719
        %v1758 = vpack.c.bf16 %v1722, %v1721
        %v1795 = vunpack.c.l.b16 %v1723
        %v1796 = vunpack.c.h.b16 %v1723
        %v1797 = vunpack.c.l.b16 %v1724
        %v1798 = vunpack.c.h.b16 %v1724
        %v1799 = vunpack.c.l.b16 %v1725
        %v1800 = vunpack.c.h.b16 %v1725
        %v1801 = vunpack.c.l.b16 %v1726
        %v1802 = vunpack.c.h.b16 %v1726
        %v1803 = vunpack.c.l.b16 %v1727
        %v1804 = vunpack.c.h.b16 %v1727
        %v1805 = vunpack.c.l.b16 %v1728
        %v1806 = vunpack.c.h.b16 %v1728
        %v1807 = vunpack.c.l.b16 %v1729
        %v1808 = vunpack.c.h.b16 %v1729
        %v1809 = vunpack.c.l.b16 %v1730
        %v1810 = vunpack.c.h.b16 %v1730
        %v1811 = vunpack.c.l.b16 %v1731
        %v1812 = vunpack.c.h.b16 %v1731
        %v1813 = vunpack.c.l.b16 %v1732
        %v1814 = vunpack.c.h.b16 %v1732
        %v1815 = vunpack.c.l.b16 %v1733
        %v1816 = vunpack.c.h.b16 %v1733
        %v1817 = vunpack.c.l.b16 %v1734
        %v1818 = vunpack.c.h.b16 %v1734
        %v1819 = vunpack.c.l.b16 %v1735
        %v1820 = vunpack.c.h.b16 %v1735
        %v1821 = vunpack.c.l.b16 %v1736
        %v1822 = vunpack.c.h.b16 %v1736
        %v1823 = vunpack.c.l.b16 %v1737
        %v1824 = vunpack.c.h.b16 %v1737
        %v1825 = vunpack.c.l.b16 %v1738
        %v1826 = vunpack.c.h.b16 %v1738
        %v1827 = vunpack.c.l.b16 %v1739
        %v1828 = vunpack.c.h.b16 %v1739
        %v1829 = vunpack.c.l.b16 %v1740
        %v1830 = vunpack.c.h.b16 %v1740
        %v1831 = vunpack.c.l.b16 %v1741
        %v1832 = vunpack.c.h.b16 %v1741
        %v1833 = vunpack.c.l.b16 %v1742
        %v1834 = vunpack.c.h.b16 %v1742
        %v1835 = vunpack.c.l.b16 %v1743
        %v1836 = vunpack.c.h.b16 %v1743
        %v1837 = vunpack.c.l.b16 %v1744
        %v1838 = vunpack.c.h.b16 %v1744
        %v1839 = vunpack.c.l.b16 %v1745
        %v1840 = vunpack.c.h.b16 %v1745
        %v1841 = vunpack.c.l.b16 %v1746
        %v1842 = vunpack.c.h.b16 %v1746
        %v1843 = vunpack.c.l.b16 %v1747
        %v1844 = vunpack.c.h.b16 %v1747
        %v1845 = vunpack.c.l.b16 %v1748
        %v1846 = vunpack.c.h.b16 %v1748
        %v1847 = vunpack.c.l.b16 %v1749
        %v1848 = vunpack.c.h.b16 %v1749
        %v1849 = vunpack.c.l.b16 %v1750
        %v1850 = vunpack.c.h.b16 %v1750
        %v1851 = vunpack.c.l.b16 %v1751
        %v1852 = vunpack.c.h.b16 %v1751
        %v1853 = vunpack.c.l.b16 %v1752
        %v1854 = vunpack.c.h.b16 %v1752
        %v1855 = vunpack.c.l.b16 %v1753
        %v1856 = vunpack.c.h.b16 %v1753
        %v1857 = vunpack.c.l.b16 %v1754
        %v1858 = vunpack.c.h.b16 %v1754
        %v1859 = vunpack.c.l.b16 %v1755
        %v1860 = vunpack.c.h.b16 %v1755
        %v1861 = vunpack.c.l.b16 %v1756
        %v1862 = vunpack.c.h.b16 %v1756
        %v1863 = vunpack.c.l.b16 %v1757
        %v1864 = vunpack.c.h.b16 %v1757
        %v1865 = vunpack.c.l.b16 %v1758
        %v1866 = vunpack.c.h.b16 %v1758
        %v1867 = vpack.c.b16 %v1795, %v1795
        %v1868 = vpack.c.b16 %v1796, %v1796
        %v1869 = vpack.c.b16 %v1797, %v1797
        %v1870 = vpack.c.b16 %v1798, %v1798
        %v1871 = vpack.c.b16 %v1799, %v1799
        %v1872 = vpack.c.b16 %v1800, %v1800
        %v1873 = vpack.c.b16 %v1801, %v1801
        %v1874 = vpack.c.b16 %v1802, %v1802
        %v1875 = vpack.c.b16 %v1803, %v1803
        %v1876 = vpack.c.b16 %v1804, %v1804
        %v1877 = vpack.c.b16 %v1805, %v1805
        %v1878 = vpack.c.b16 %v1806, %v1806
        %v1879 = vpack.c.b16 %v1807, %v1807
        %v1880 = vpack.c.b16 %v1808, %v1808
        %v1881 = vpack.c.b16 %v1809, %v1809
        %v1882 = vpack.c.b16 %v1810, %v1810
        %v1883 = vpack.c.b16 %v1811, %v1811
        %v1884 = vpack.c.b16 %v1812, %v1812
        %v1885 = vpack.c.b16 %v1813, %v1813
        %v1886 = vpack.c.b16 %v1814, %v1814
        %v1887 = vpack.c.b16 %v1815, %v1815
        %v1888 = vpack.c.b16 %v1816, %v1816
        %v1889 = vpack.c.b16 %v1817, %v1817
        %v1890 = vpack.c.b16 %v1818, %v1818
        %v1891 = vpack.c.b16 %v1819, %v1819
        %v1892 = vpack.c.b16 %v1820, %v1820
        %v1893 = vpack.c.b16 %v1821, %v1821
        %v1894 = vpack.c.b16 %v1822, %v1822
        %v1895 = vpack.c.b16 %v1823, %v1823
        %v1896 = vpack.c.b16 %v1824, %v1824
        %v1897 = vpack.c.b16 %v1825, %v1825
        %v1898 = vpack.c.b16 %v1826, %v1826
        %v1899 = vpack.c.b16 %v1827, %v1827
        %v1900 = vpack.c.b16 %v1828, %v1828
        %v1901 = vpack.c.b16 %v1829, %v1829
        %v1902 = vpack.c.b16 %v1830, %v1830
        %v1903 = vpack.c.b16 %v1831, %v1831
        %v1904 = vpack.c.b16 %v1832, %v1832
        %v1905 = vpack.c.b16 %v1833, %v1833
        %v1906 = vpack.c.b16 %v1834, %v1834
        %v1907 = vpack.c.b16 %v1835, %v1835
        %v1908 = vpack.c.b16 %v1836, %v1836
        %v1909 = vpack.c.b16 %v1837, %v1837
        %v1910 = vpack.c.b16 %v1838, %v1838
        %v1911 = vpack.c.b16 %v1839, %v1839
        %v1912 = vpack.c.b16 %v1840, %v1840
        %v1913 = vpack.c.b16 %v1841, %v1841
        %v1914 = vpack.c.b16 %v1842, %v1842
        %v1915 = vpack.c.b16 %v1843, %v1843
        %v1916 = vpack.c.b16 %v1844, %v1844
        %v1917 = vpack.c.b16 %v1845, %v1845
        %v1918 = vpack.c.b16 %v1846, %v1846
        %v1919 = vpack.c.b16 %v1847, %v1847
        %v1920 = vpack.c.b16 %v1848, %v1848
        %v1921 = vpack.c.b16 %v1849, %v1849
        %v1922 = vpack.c.b16 %v1850, %v1850
        %v1923 = vpack.c.b16 %v1851, %v1851
        %v1924 = vpack.c.b16 %v1852, %v1852
        %v1925 = vpack.c.b16 %v1853, %v1853
        %v1926 = vpack.c.b16 %v1854, %v1854
        %v1927 = vpack.c.b16 %v1855, %v1855
        %v1928 = vpack.c.b16 %v1856, %v1856
        %v1929 = vpack.c.b16 %v1857, %v1857
        %v1930 = vpack.c.b16 %v1858, %v1858
        %v1931 = vpack.c.b16 %v1859, %v1859
        %v1932 = vpack.c.b16 %v1860, %v1860
        %v1933 = vpack.c.b16 %v1861, %v1861
        %v1934 = vpack.c.b16 %v1862, %v1862
        %v1935 = vpack.c.b16 %v1863, %v1863
        %v1936 = vpack.c.b16 %v1864, %v1864
        %v1937 = vpack.c.b16 %v1865, %v1865
        %v1938 = vpack.c.b16 %v1866, %v1866
        %2011 = vst [vmem:[%s257] sm:$0xf] %v1867
        %2012 = vst [vmem:[%s257 + $0x4] sm:$0xf] %v1868
        %2013 = vst [vmem:[%s257 + $0x8] sm:$0xf] %v1869
        %2014 = vst [vmem:[%s257 + $0xc] sm:$0xf] %v1870
        %2015 = vst [vmem:[%s257 + $0x10] sm:$0xf] %v1871
        %2016 = vst [vmem:[%s257 + $0x14] sm:$0xf] %v1872
        %2017 = vst [vmem:[%s257 + $0x18] sm:$0xf] %v1873
        %2018 = vst [vmem:[%s257 + $0x1c] sm:$0xf] %v1874
        %2019 = vst [vmem:[%s257 + $0x20] sm:$0xf] %v1875
        %2020 = vst [vmem:[%s257 + $0x24] sm:$0xf] %v1876
        %2021 = vst [vmem:[%s257 + $0x28] sm:$0xf] %v1877
        %2022 = vst [vmem:[%s257 + $0x2c] sm:$0xf] %v1878
        %2023 = vst [vmem:[%s257 + $0x30] sm:$0xf] %v1879
        %2024 = vst [vmem:[%s257 + $0x34] sm:$0xf] %v1880
        %2025 = vst [vmem:[%s257 + $0x38] sm:$0xf] %v1881
        %2026 = vst [vmem:[%s257 + $0x3c] sm:$0xf] %v1882
        %2027 = vst [vmem:[%s257 + $0x40] sm:$0xf] %v1883
        %2028 = vst [vmem:[%s257 + $0x44] sm:$0xf] %v1884
        %2029 = vst [vmem:[%s257 + $0x48] sm:$0xf] %v1885
        %2030 = vst [vmem:[%s257 + $0x4c] sm:$0xf] %v1886
        %2031 = vst [vmem:[%s257 + $0x50] sm:$0xf] %v1887
        %2032 = vst [vmem:[%s257 + $0x54] sm:$0xf] %v1888
        %2033 = vst [vmem:[%s257 + $0x58] sm:$0xf] %v1889
        %2034 = vst [vmem:[%s257 + $0x5c] sm:$0xf] %v1890
        %2035 = vst [vmem:[%s257 + $0x60] sm:$0xf] %v1891
        %2036 = vst [vmem:[%s257 + $0x64] sm:$0xf] %v1892
        %2037 = vst [vmem:[%s257 + $0x68] sm:$0xf] %v1893
        %2038 = vst [vmem:[%s257 + $0x6c] sm:$0xf] %v1894
        %2039 = vst [vmem:[%s257 + $0x70] sm:$0xf] %v1895
        %2040 = vst [vmem:[%s257 + $0x74] sm:$0xf] %v1896
        %2041 = vst [vmem:[%s257 + $0x78] sm:$0xf] %v1897
        %2042 = vst [vmem:[%s257 + $0x7c] sm:$0xf] %v1898
        %2043 = vst [vmem:[%s257 + $0x80] sm:$0xf] %v1899
        %2044 = vst [vmem:[%s257 + $0x84] sm:$0xf] %v1900
        %2045 = vst [vmem:[%s257 + $0x88] sm:$0xf] %v1901
        %2046 = vst [vmem:[%s257 + $0x8c] sm:$0xf] %v1902
        %2047 = vst [vmem:[%s257 + $0x90] sm:$0xf] %v1903
        %2048 = vst [vmem:[%s257 + $0x94] sm:$0xf] %v1904
        %2049 = vst [vmem:[%s257 + $0x98] sm:$0xf] %v1905
        %2050 = vst [vmem:[%s257 + $0x9c] sm:$0xf] %v1906
        %2051 = vst [vmem:[%s257 + $0xa0] sm:$0xf] %v1907
        %2052 = vst [vmem:[%s257 + $0xa4] sm:$0xf] %v1908
        %2053 = vst [vmem:[%s257 + $0xa8] sm:$0xf] %v1909
        %2054 = vst [vmem:[%s257 + $0xac] sm:$0xf] %v1910
        %2055 = vst [vmem:[%s257 + $0xb0] sm:$0xf] %v1911
        %2056 = vst [vmem:[%s257 + $0xb4] sm:$0xf] %v1912
        %2057 = vst [vmem:[%s257 + $0xb8] sm:$0xf] %v1913
        %2058 = vst [vmem:[%s257 + $0xbc] sm:$0xf] %v1914
        %2059 = vst [vmem:[%s257 + $0xc0] sm:$0xf] %v1915
        %2060 = vst [vmem:[%s257 + $0xc4] sm:$0xf] %v1916
        %2061 = vst [vmem:[%s257 + $0xc8] sm:$0xf] %v1917
        %2062 = vst [vmem:[%s257 + $0xcc] sm:$0xf] %v1918
        %2063 = vst [vmem:[%s257 + $0xd0] sm:$0xf] %v1919
        %2064 = vst [vmem:[%s257 + $0xd4] sm:$0xf] %v1920
        %2065 = vst [vmem:[%s257 + $0xd8] sm:$0xf] %v1921
        %2066 = vst [vmem:[%s257 + $0xdc] sm:$0xf] %v1922
        %2067 = vst [vmem:[%s257 + $0xe0] sm:$0xf] %v1923
        %2068 = vst [vmem:[%s257 + $0xe4] sm:$0xf] %v1924
        %2069 = vst [vmem:[%s257 + $0xe8] sm:$0xf] %v1925
        %2070 = vst [vmem:[%s257 + $0xec] sm:$0xf] %v1926
        %2071 = vst [vmem:[%s257 + $0xf0] sm:$0xf] %v1927
        %2072 = vst [vmem:[%s257 + $0xf4] sm:$0xf] %v1928
        %2073 = vst [vmem:[%s257 + $0xf8] sm:$0xf] %v1929
        %2074 = vst [vmem:[%s257 + $0xfc] sm:$0xf] %v1930
        %2075 = vst [vmem:[%s257 + $0x100] sm:$0xf] %v1931
        %2076 = vst [vmem:[%s257 + $0x104] sm:$0xf] %v1932
        %2077 = vst [vmem:[%s257 + $0x108] sm:$0xf] %v1933
        %2078 = vst [vmem:[%s257 + $0x10c] sm:$0xf] %v1934
        %2079 = vst [vmem:[%s257 + $0x110] sm:$0xf] %v1935
        %2080 = vst [vmem:[%s257 + $0x114] sm:$0xf] %v1936
        %2081 = vst [vmem:[%s257 + $0x118] sm:$0xf] %v1937
        %2082 = vst [vmem:[%s257 + $0x11c] sm:$0xf] %v1938
        %s2083 = sand.u32 %s120, 1
        %s2084 = scalar_lea.sflag [#allocation4], %s2083
        %s2085 = sand.u32 %s120, 1
        %s2086 = smul.addr %s2085, 288
        %s2087 = scalar_lea.vmem [#allocation10], %s2086
        // Predicated region
        $region53: #{tpu_custom_call.1} parent=35 // pred_check
          %p2088 = pneg %p130
        $region54: #{tpu_custom_call.1} parent=35 // pred_check_branch
          %2090 = sbr.rel (%p2088) target = $region56
        $region55: #{tpu_custom_call.1} parent=35 // pred_region
          %s2092 = ssub.s32 4608, 4608
          %2093 = vsyncadd %s2084, %s2092
          %s2094 = smul.addr %s23, 72
          %s2095 = smul.addr %s2094, 64
          %s2096 = scalar_lea.hbm %s4, %s2095
          %s2097 = sshll.u32 %s2087, 4
          %s2098 = int_to_ptr.vmem [resolvable:$true] %s2097
          %2103 = dma.vmem_to_hbm [thread:$0]  %s2098, 4608, %s2096, %s2084, 64, 64, 4
        $region56: #{tpu_custom_call.1} parent=35 // pred_fallthru
          _
      $region36: #{tpu_custom_call.1} parent=5 // pred_fallthru
        _
      %p2104 = scmp.le.s32.totalorder 2, %s18
      // Predicated region
      $region57: #{tpu_custom_call.1} parent=5 // pred_check
        %p2105 = pneg %p2104
      $region58: #{tpu_custom_call.1} parent=5 // pred_check_branch
        %2107 = sbr.rel (%p2105) target = $region60
      $region59: #{tpu_custom_call.1} parent=5 // pred_region
        %s2108 = ssub.s32 %s18, 2
        // Predicated region
        $region61: #{tpu_custom_call.1} parent=59 // pred_check
          %p2109 = pneg %p136
        $region62: #{tpu_custom_call.1} parent=59 // pred_check_branch
          %2111 = sbr.rel (%p2109) target = $region64
        $region63: #{tpu_custom_call.1} parent=59 // pred_region
          %s2112 = sand.u32 %s121, 1
          %s2113 = scalar_lea.sflag [#allocation4], %s2112
          %s2114 = sand.u32 %s121, 1
          %s2115 = smul.addr %s2114, 288
          %s2116 = scalar_lea.vmem [#allocation10], %s2115
          %2117 = dma.done %s2113, 4608
        $region64: #{tpu_custom_call.1} parent=59 // pred_fallthru
          _
      $region60: #{tpu_custom_call.1} parent=5 // pred_fallthru
        _
    $region6: #{tpu_custom_call.1} parent=1 // loop_footer
      %s22 = sadd.s32 1, %s18
    $region7: #{tpu_custom_call.1} parent=1 // loop_footer_branch
      %17 = sbr.rel target = $region3
    $region8: #{tpu_custom_call.1} parent=1 // loop_exit
      _
    %2118 = vsyncpa [#allocation3], 1
    %s2119 = scalar_lea.sflag [#allocation3], 1
    %2120 = vsyncpa %s2119, 1
    %2121 = vsyncpa [#allocation6], 1
    %2122 = vsyncpa [#allocation9], 1
    %2123 = vsyncpa [#allocation4], 1
    %s2124 = scalar_lea.sflag [#allocation4], 1
    %2125 = vsyncpa %s2124, 1

</llo_original>
